<compile_context>
chip_gen: v7x
topology: tpu7x:2x2x1
jax: 0.10.0
libtpu: 0.0.40
codegen_flags: <defaults>
</compile_context>

<pallas_src>
import jax
import jax.numpy as jnp
from jax.experimental import pallas as pl
from jax.experimental.pallas import tpu as pltpu

# ----------------------------- config (small, deterministic) -----------------------------
B = 2                       # batch
N = 64                      # points
NUM_OBJS = 2                # M (mask_dim == num_objs)
MASK_DIM = NUM_OBJS
XYZ_DIM = 3
PC_DIM = XYZ_DIM + MASK_DIM            # channels of the raw point cloud (5)
STATE_DIM = 8
NUM_HEADS = NUM_OBJS + 2               # background + per-object + all-points PointNets (4)
CIN = XYZ_DIM + STATE_DIM              # per-point input channels of each PointNet (11)
HID = 32                               # point-MLP hidden width (per head)
PN_FEAT = 32                           # per-PointNet output feature
H_ALL = NUM_HEADS * HID                # 128  (fused hidden width, lane-dense)
F_ALL = NUM_HEADS * PN_FEAT            # 128  (fused PN feature width, lane-dense)
STATE_FEAT = 32
GLOBAL_IN = STATE_FEAT + F_ALL         # 160
GLOBAL_HID = 64
GLOBAL_OUT = 16
GLOBAL_OUT_PAD = 128                   # lane-dense output width stored by the kernel
STACK_FRAME = 1                        # single pooling group over all N points

NEG_BIG = -1e10                        # masked_max fill value

# ----------------------------- packed weight slab layouts -----------------------------
# Slab A: point-MLP path (all blocks 128 lanes wide, block starts on 8-row boundaries).
A_W1P = 0                   # rows 0:8   per-head W1 xyz rows (seg rows kept zero)
A_SEL = 8                   # rows 8:16  sign selector rows for the seg channels
A_W1S = 16                  # rows 16:24 per-head W1 state rows
A_VEC = 24                  # rows 24:32 packed rows: b1, thresh, b2, bg
A_W2 = 32                   # rows 32:160  block-diagonal W2 (128,128)
A_WG = 160                  # rows 160:288 block-diagonal Wg (128,128)
A_ROWS = 288

# Slab B: state-MLP + global-MLP path (everything padded to 128 lanes / 128 rows).
B_WS1 = 0                   # rows 0:8    ws1 (8,32)   in cols 0:32
B_VEC = 8                   # rows 8:16   packed rows: bs1, bs2, bf1, bf2
B_WS2 = 16                  # rows 16:144 ws2 (32,32)  in rows 0:32, cols 0:32
B_WF1S = 144                # rows 144:272 wf1[:32]    in rows 0:32, cols 0:64
B_WF1P = 272                # rows 272:400 wf1[32:]    in rows 0:128, cols 0:64
B_WF2 = 400                 # rows 400:528 wf2 (64,16) in rows 0:64, cols 0:16
B_ROWS = 528

# Advisory cost estimate (static python ints).
_FLOPS = (2 * (B * N) * PC_DIM * F_ALL        # mask selector
          + 2 * (B * N) * PC_DIM * H_ALL      # point MLP layer 1 (pc part)
          + 2 * B * STATE_DIM * H_ALL         # point MLP layer 1 (state part)
          + 2 * (B * N) * H_ALL * F_ALL       # point MLP layer 2
          + 2 * B * F_ALL * F_ALL             # per-head final linear
          + 2 * B * (STATE_DIM * 128 + 3 * 128 * 128))   # state + global MLPs
_BYTES = 4 * (B * N * PC_DIM + B * STATE_DIM
              + A_ROWS * 128 + B_ROWS * 128 + B * GLOBAL_OUT_PAD)


# ----------------------------- fused Pallas kernel (single step) -----------------------------
def fused_kernel(pc_ref, state_ref, wa_ref, wb_ref, o_ref):
    """Whole forward for the whole batch in one invocation.

    pc_ref:    (B*N, PC_DIM)  raw point cloud rows (xyz ⧺ seg), batch folded into sublanes
    state_ref: (B, STATE_DIM)
    wa_ref:    (A_ROWS, 128)  packed point-MLP weights (see layout constants)
    wb_ref:    (B_ROWS, 128)  packed state/global MLP weights
    o_ref:     (B, GLOBAL_OUT_PAD) lane-dense output (cols >= GLOBAL_OUT are zero)
    """
    f32 = jnp.float32
    pc = pc_ref[...]                    # (B*N, PC_DIM)
    st = state_ref[...]                 # (B, STATE_DIM)

    # Packed (1,128) rows: b1, per-lane compare threshold, b2, bg.
    vec_a = wa_ref[A_VEC:A_VEC + 8, :]
    b1, thresh, b2, bg = vec_a[0:1], vec_a[1:2], vec_a[2:3], vec_a[3:4]

    # Per-head per-point keep mask via sign/threshold selector:
    #   bg lanes:  -(sum seg) > -0.5  <=>  sum(seg) <= 0.5  (binary seg)
    #   obj lanes:  seg_i      >  0.5
    #   all lanes:  0          > -1.0  (always)
    sel_val = jnp.dot(pc, wa_ref[A_SEL:A_SEL + PC_DIM, :], preferred_element_type=f32)
    keep = sel_val > thresh                                                    # (B*N, F_ALL)

    # Point MLP layer 1.  pc term over all B*N rows; (state @ W1s + b1) computed
    # once per batch row and broadcast over that row's N points (tile-aligned reshape).
    h_pc = jnp.dot(pc, wa_ref[A_W1P:A_W1P + PC_DIM, :], preferred_element_type=f32)   # (B*N, H_ALL)
    row = jnp.dot(st, wa_ref[A_W1S:A_W1S + STATE_DIM, :], preferred_element_type=f32) + b1  # (B, H_ALL)
    h1 = jnp.maximum(h_pc.reshape(B, N, H_ALL) + row[:, None, :], 0.0).reshape(B * N, H_ALL)

    # Point MLP layer 2: full (128,128,128) MXU tile (block-diagonal per head).
    h2 = jnp.maximum(
        jnp.dot(h1, wa_ref[A_W2:A_W2 + H_ALL, :], preferred_element_type=f32) + b2, 0.0)  # (B*N, F_ALL)

    # Per-batch masked max-pool over the point axis (stack_frame == 1).
    pooled = jnp.max(jnp.where(keep, h2, NEG_BIG).reshape(B, N, F_ALL), axis=1)            # (B, F_ALL)

    # Per-head final linear (block-diagonal Wg).
    pn = jnp.dot(pooled, wa_ref[A_WG:A_WG + F_ALL, :], preferred_element_type=f32) + bg    # (B, F_ALL)

    # State MLP + global MLP, all weights lane/row padded to 128 (padding is zero,
    # so the extra lanes stay exactly zero through every layer).
    vec_b = wb_ref[B_VEC:B_VEC + 8, :]
    bs1, bs2, bf1, bf2 = vec_b[0:1], vec_b[1:2], vec_b[2:3], vec_b[3:4]

    sh = jnp.maximum(
        jnp.dot(st, wb_ref[B_WS1:B_WS1 + STATE_DIM, :], preferred_element_type=f32) + bs1, 0.0)
    sf = jnp.dot(sh, wb_ref[B_WS2:B_WS2 + 128, :], preferred_element_type=f32) + bs2       # (B, 128)

    gh = jnp.maximum(
        jnp.dot(sf, wb_ref[B_WF1S:B_WF1S + 128, :], preferred_element_type=f32)
        + jnp.dot(pn, wb_ref[B_WF1P:B_WF1P + 128, :], preferred_element_type=f32)
        + bf1, 0.0)                                                                        # (B, 128)

    o_ref[...] = jnp.dot(gh, wb_ref[B_WF2:B_WF2 + 128, :], preferred_element_type=f32) + bf2


@jax.jit
def pointnet_with_instance_info_forward(pc, state, slab_a, slab_b):
    """pc: (B, N, 3+MASK_DIM) f32, state: (B, STATE_DIM) f32 -> (B, GLOBAL_OUT) f32."""
    pc2d = pc.reshape(B * N, PC_DIM)     # free metadata reshape; batch folded into sublanes
    out_pad = pl.pallas_call(
        fused_kernel,
        out_shape=jax.ShapeDtypeStruct((B, GLOBAL_OUT_PAD), jnp.float32),
        in_specs=[pl.BlockSpec(memory_space=pltpu.MemorySpace.VMEM)] * 4,
        out_specs=pl.BlockSpec(memory_space=pltpu.MemorySpace.VMEM),
        cost_estimate=pl.CostEstimate(flops=_FLOPS, transcendentals=0, bytes_accessed=_BYTES),
    )(pc2d, state, slab_a, slab_b)
    return out_pad[:, :GLOBAL_OUT]       # lane-dense store in-kernel, slice outside


# ----------------------------- parameters -----------------------------
def _block_diag(mats):
    n = len(mats)
    r, c = mats[0].shape
    out = jnp.zeros((n * r, n * c), mats[0].dtype)
    for i, m in enumerate(mats):
        out = out.at[i * r:(i + 1) * r, i * c:(i + 1) * c].set(m)
    return out


def init_params(key):
    """Per-head / per-module weights, mirroring the PyTorch module structure."""
    ks = jax.random.split(key, 6 * NUM_HEADS + 8)
    s = 0.1
    heads = []
    i = 0
    for _ in range(NUM_HEADS):
        heads.append(dict(
            w1=s * jax.random.normal(ks[i + 0], (CIN, HID), jnp.float32),
            b1=s * jax.random.normal(ks[i + 1], (HID,), jnp.float32),
            w2=s * jax.random.normal(ks[i + 2], (HID, PN_FEAT), jnp.float32),
            b2=s * jax.random.normal(ks[i + 3], (PN_FEAT,), jnp.float32),
            wg=s * jax.random.normal(ks[i + 4], (PN_FEAT, PN_FEAT), jnp.float32),
            bg=s * jax.random.normal(ks[i + 5], (PN_FEAT,), jnp.float32),
        ))
        i += 6
    return dict(
        heads=heads,
        ws1=s * jax.random.normal(ks[i + 0], (STATE_DIM, STATE_FEAT), jnp.float32),
        bs1=s * jax.random.normal(ks[i + 1], (STATE_FEAT,), jnp.float32),
        ws2=s * jax.random.normal(ks[i + 2], (STATE_FEAT, STATE_FEAT), jnp.float32),
        bs2=s * jax.random.normal(ks[i + 3], (STATE_FEAT,), jnp.float32),
        wf1=s * jax.random.normal(ks[i + 4], (GLOBAL_IN, GLOBAL_HID), jnp.float32),
        bf1=jnp.zeros((GLOBAL_HID,), jnp.float32),
        wf2=s * jax.random.normal(ks[i + 5], (GLOBAL_HID, GLOBAL_OUT), jnp.float32),
        bf2=jnp.zeros((GLOBAL_OUT,), jnp.float32),
    )


def pack_params(p):
    """Assemble the two packed weight slabs consumed by the kernel."""
    heads = p["heads"]
    w1_cat = jnp.concatenate([h["w1"] for h in heads], axis=1)            # (CIN, H_ALL)
    b1_cat = jnp.concatenate([h["b1"] for h in heads])                    # (H_ALL,)
    b2_cat = jnp.concatenate([h["b2"] for h in heads])
    bg_cat = jnp.concatenate([h["bg"] for h in heads])
    w2_bd = _block_diag([h["w2"] for h in heads])                         # (H_ALL, F_ALL)
    wg_bd = _block_diag([h["wg"] for h in heads])                         # (F_ALL, F_ALL)

    # Sign selector rows for the seg channels (bg block = -1, object i block = +1).
    sel_seg = jnp.zeros((MASK_DIM, F_ALL), jnp.float32)
    sel_seg = sel_seg.at[:, 0:PN_FEAT].set(-1.0)
    for j in range(NUM_OBJS):
        sel_seg = sel_seg.at[j, (j + 1) * PN_FEAT:(j + 2) * PN_FEAT].set(1.0)
    # Per-lane compare thresholds: bg -0.5, objects +0.5, all-points -1 (always true).
    thresh = jnp.zeros((F_ALL,), jnp.float32)
    thresh = thresh.at[0:PN_FEAT].set(-0.5)
    for j in range(NUM_OBJS):
        thresh = thresh.at[(j + 1) * PN_FEAT:(j + 2) * PN_FEAT].set(0.5)
    thresh = thresh.at[(NUM_HEADS - 1) * PN_FEAT:].set(-1.0)

    slab_a = jnp.zeros((A_ROWS, F_ALL), jnp.float32)
    slab_a = slab_a.at[A_W1P:A_W1P + XYZ_DIM, :].set(w1_cat[:XYZ_DIM])    # seg rows stay 0
    slab_a = slab_a.at[A_SEL + XYZ_DIM:A_SEL + PC_DIM, :].set(sel_seg)
    slab_a = slab_a.at[A_W1S:A_W1S + STATE_DIM, :].set(w1_cat[XYZ_DIM:])
    slab_a = slab_a.at[A_VEC + 0, :].set(b1_cat)
    slab_a = slab_a.at[A_VEC + 1, :].set(thresh)
    slab_a = slab_a.at[A_VEC + 2, :].set(b2_cat)
    slab_a = slab_a.at[A_VEC + 3, :].set(bg_cat)
    slab_a = slab_a.at[A_W2:A_W2 + H_ALL, :].set(w2_bd)
    slab_a = slab_a.at[A_WG:A_WG + F_ALL, :].set(wg_bd)

    slab_b = jnp.zeros((B_ROWS, 128), jnp.float32)
    slab_b = slab_b.at[B_WS1:B_WS1 + STATE_DIM, :STATE_FEAT].set(p["ws1"])
    slab_b = slab_b.at[B_VEC + 0, :STATE_FEAT].set(p["bs1"])
    slab_b = slab_b.at[B_VEC + 1, :STATE_FEAT].set(p["bs2"])
    slab_b = slab_b.at[B_VEC + 2, :GLOBAL_HID].set(p["bf1"])
    slab_b = slab_b.at[B_VEC + 3, :GLOBAL_OUT].set(p["bf2"])
    slab_b = slab_b.at[B_WS2:B_WS2 + STATE_FEAT, :STATE_FEAT].set(p["ws2"])
    slab_b = slab_b.at[B_WF1S:B_WF1S + STATE_FEAT, :GLOBAL_HID].set(p["wf1"][:STATE_FEAT])
    slab_b = slab_b.at[B_WF1P:B_WF1P + F_ALL, :GLOBAL_HID].set(p["wf1"][STATE_FEAT:])
    slab_b = slab_b.at[B_WF2:B_WF2 + GLOBAL_HID, :GLOBAL_OUT].set(p["wf2"])

    return dict(slab_a=slab_a, slab_b=slab_b)


# ----------------------------- pure-JAX reference (module structure) -----------------------------
def reference_forward(pc, state, p):
    xyz = pc[:, :, :XYZ_DIM]
    seg = pc[:, :, XYZ_DIM:XYZ_DIM + MASK_DIM]
    bg_mask = 1.0 - (jnp.sum(seg, axis=-1) > 0.5).astype(jnp.float32)
    masks = [bg_mask] + [seg[..., i] for i in range(NUM_OBJS)] + [jnp.ones_like(seg[..., 0])]

    sh = jnp.maximum(state @ p["ws1"] + p["bs1"], 0.0)
    feats = [sh @ p["ws2"] + p["bs2"]]

    st_rep = jnp.broadcast_to(state[:, None, :], (B, N, STATE_DIM))
    pts = jnp.concatenate([xyz, st_rep], axis=-1)
    for head, m in zip(p["heads"], masks):
        h1 = jnp.maximum(pts @ head["w1"] + head["b1"], 0.0)
        h2 = jnp.maximum(h1 @ head["w2"] + head["b2"], 0.0)
        pooled = jnp.max(jnp.where(m[..., None] > 0.5, h2, NEG_BIG), axis=1)
        feats.append(pooled @ head["wg"] + head["bg"])

    gf = jnp.concatenate(feats, axis=-1)
    gh = jnp.maximum(gf @ p["wf1"] + p["bf1"], 0.0)
    return gh @ p["wf2"] + p["bf2"]


# ----------------------------- main -----------------------------
if __name__ == "__main__":
    key = jax.random.PRNGKey(0)
    k_xyz, k_lbl, k_state, k_par = jax.random.split(key, 4)

    xyz = jax.random.normal(k_xyz, (B, N, XYZ_DIM), jnp.float32)
    # per-point label in {0(background), 1..NUM_OBJS}; seg = one-hot over objects
    labels = jax.random.randint(k_lbl, (B, N), 0, NUM_OBJS + 1)
    seg = jax.nn.one_hot(labels, NUM_OBJS + 1, dtype=jnp.float32)[..., 1:]     # (B, N, M)
    pc = jnp.concatenate([xyz, seg], axis=-1)                                  # (B, N, 3+M)
    state = jax.random.normal(k_state, (B, STATE_DIM), jnp.float32)

    params = init_params(k_par)
    packed = pack_params(params)

    out = pointnet_with_instance_info_forward(pc, state, packed["slab_a"], packed["slab_b"])
    out = jax.block_until_ready(out)
    assert out.shape == (B, GLOBAL_OUT) and out.dtype == jnp.float32

    ref = reference_forward(pc, state, params)
    max_err = float(jnp.max(jnp.abs(out - ref)))
    assert jnp.allclose(out, ref, atol=1e-4, rtol=1e-3), f"max_err={max_err}"

    print("KERNEL_OK")
</pallas_src>

<mosaic_0001>
module attributes {stable_mosaic.version = 11 : i64} {
  func.func @fused_kernel(%arg0: memref<128x5xf32, #tpu.memory_space<vmem>>, %arg1: memref<2x8xf32, #tpu.memory_space<vmem>>, %arg2: memref<288x128xf32, #tpu.memory_space<vmem>>, %arg3: memref<528x128xf32, #tpu.memory_space<vmem>>, %arg4: memref<2x128xf32, #tpu.memory_space<vmem>>) attributes {dimension_semantics = [], scalar_prefetch = 0 : i64, scratch_operands = 0 : i64, tpu.core_type = #tpu.core_type<tc>} {
    %c0 = arith.constant 0 : index
    %c0_0 = arith.constant 0 : index
    %0 = vector.load %arg0[%c0, %c0_0] : memref<128x5xf32, #tpu.memory_space<vmem>>, vector<128x5xf32>
    %c0_1 = arith.constant 0 : index
    %c0_2 = arith.constant 0 : index
    %1 = vector.load %arg1[%c0_1, %c0_2] : memref<2x8xf32, #tpu.memory_space<vmem>>, vector<2x8xf32>
    %c24 = arith.constant 24 : index
    %c0_3 = arith.constant 0 : index
    %2 = vector.load %arg2[%c24, %c0_3] : memref<288x128xf32, #tpu.memory_space<vmem>>, vector<8x128xf32>
    %3 = vector.extract_strided_slice %2 {offsets = [0, 0], sizes = [1, 128], strides = [1, 1]} : vector<8x128xf32> to vector<1x128xf32>
    %4 = vector.extract_strided_slice %2 {offsets = [1, 0], sizes = [1, 128], strides = [1, 1]} : vector<8x128xf32> to vector<1x128xf32>
    %5 = vector.extract_strided_slice %2 {offsets = [2, 0], sizes = [1, 128], strides = [1, 1]} : vector<8x128xf32> to vector<1x128xf32>
    %6 = vector.extract_strided_slice %2 {offsets = [3, 0], sizes = [1, 128], strides = [1, 1]} : vector<8x128xf32> to vector<1x128xf32>
    %c8 = arith.constant 8 : index
    %c0_4 = arith.constant 0 : index
    %7 = vector.load %arg2[%c8, %c0_4] : memref<288x128xf32, #tpu.memory_space<vmem>>, vector<5x128xf32>
    %cst = arith.constant dense<0.000000e+00> : vector<128x128xf32>
    %8 = tpu.matmul %0, %7, %cst {dimension_numbers = #tpu.dot_dimension_numbers<[1], [0], [0], [1], [0, 0, 1, 1], [], []>} : vector<128x5xf32>, vector<5x128xf32>, vector<128x128xf32> -> vector<128x128xf32>
    %9 = vector.broadcast %4 : vector<1x128xf32> to vector<128x128xf32>
    %10 = arith.cmpf ogt, %8, %9 : vector<128x128xf32>
    %c0_5 = arith.constant 0 : index
    %c0_6 = arith.constant 0 : index
    %11 = vector.load %arg2[%c0_5, %c0_6] : memref<288x128xf32, #tpu.memory_space<vmem>>, vector<5x128xf32>
    %cst_7 = arith.constant dense<0.000000e+00> : vector<128x128xf32>
    %12 = tpu.matmul %0, %11, %cst_7 {dimension_numbers = #tpu.dot_dimension_numbers<[1], [0], [0], [1], [0, 0, 1, 1], [], []>} : vector<128x5xf32>, vector<5x128xf32>, vector<128x128xf32> -> vector<128x128xf32>
    %c16 = arith.constant 16 : index
    %c0_8 = arith.constant 0 : index
    %13 = vector.load %arg2[%c16, %c0_8] : memref<288x128xf32, #tpu.memory_space<vmem>>, vector<8x128xf32>
    %cst_9 = arith.constant dense<0.000000e+00> : vector<2x128xf32>
    %14 = tpu.matmul %1, %13, %cst_9 {dimension_numbers = #tpu.dot_dimension_numbers<[1], [0], [0], [1], [0, 0, 1, 1], [], []>} : vector<2x8xf32>, vector<8x128xf32>, vector<2x128xf32> -> vector<2x128xf32>
    %15 = vector.broadcast %3 : vector<1x128xf32> to vector<2x128xf32>
    %16 = arith.addf %14, %15 : vector<2x128xf32>
    %17 = vector.shape_cast %12 : vector<128x128xf32> to vector<2x64x128xf32>
    %18 = vector.shape_cast %16 : vector<2x128xf32> to vector<2x1x128xf32>
    %19 = vector.broadcast %18 : vector<2x1x128xf32> to vector<2x64x128xf32>
    %20 = arith.addf %17, %19 : vector<2x64x128xf32>
    %cst_10 = arith.constant 0.000000e+00 : f32
    %21 = vector.broadcast %cst_10 : f32 to vector<2x64x128xf32>
    %22 = arith.maximumf %20, %21 : vector<2x64x128xf32>
    %23 = vector.shape_cast %22 : vector<2x64x128xf32> to vector<128x128xf32>
    %c32 = arith.constant 32 : index
    %c0_11 = arith.constant 0 : index
    %24 = vector.load %arg2[%c32, %c0_11] : memref<288x128xf32, #tpu.memory_space<vmem>>, vector<128x128xf32>
    %cst_12 = arith.constant dense<0.000000e+00> : vector<128x128xf32>
    %25 = tpu.matmul %23, %24, %cst_12 {dimension_numbers = #tpu.dot_dimension_numbers<[1], [0], [0], [1], [0, 0, 1, 1], [], []>} : vector<128x128xf32>, vector<128x128xf32>, vector<128x128xf32> -> vector<128x128xf32>
    %26 = vector.broadcast %5 : vector<1x128xf32> to vector<128x128xf32>
    %27 = arith.addf %25, %26 : vector<128x128xf32>
    %cst_13 = arith.constant 0.000000e+00 : f32
    %28 = vector.broadcast %cst_13 : f32 to vector<128x128xf32>
    %29 = arith.maximumf %27, %28 : vector<128x128xf32>
    %cst_14 = arith.constant -1.000000e+10 : f32
    %30 = vector.broadcast %cst_14 : f32 to vector<128x128xf32>
    %31 = arith.select %10, %29, %30 : vector<128x128xi1>, vector<128x128xf32>
    %32 = vector.shape_cast %31 : vector<128x128xf32> to vector<2x64x128xf32>
    %cst_15 = arith.constant dense<0xFF800000> : vector<2x128xf32>
    %33 = vector.multi_reduction <maximumf>, %32, %cst_15 [1] : vector<2x64x128xf32> to vector<2x128xf32>
    %c160 = arith.constant 160 : index
    %c0_16 = arith.constant 0 : index
    %34 = vector.load %arg2[%c160, %c0_16] : memref<288x128xf32, #tpu.memory_space<vmem>>, vector<128x128xf32>
    %cst_17 = arith.constant dense<0.000000e+00> : vector<2x128xf32>
    %35 = tpu.matmul %33, %34, %cst_17 {dimension_numbers = #tpu.dot_dimension_numbers<[1], [0], [0], [1], [0, 0, 1, 1], [], []>} : vector<2x128xf32>, vector<128x128xf32>, vector<2x128xf32> -> vector<2x128xf32>
    %36 = vector.broadcast %6 : vector<1x128xf32> to vector<2x128xf32>
    %37 = arith.addf %35, %36 : vector<2x128xf32>
    %c8_18 = arith.constant 8 : index
    %c0_19 = arith.constant 0 : index
    %38 = vector.load %arg3[%c8_18, %c0_19] : memref<528x128xf32, #tpu.memory_space<vmem>>, vector<8x128xf32>
    %39 = vector.extract_strided_slice %38 {offsets = [0, 0], sizes = [1, 128], strides = [1, 1]} : vector<8x128xf32> to vector<1x128xf32>
    %40 = vector.extract_strided_slice %38 {offsets = [1, 0], sizes = [1, 128], strides = [1, 1]} : vector<8x128xf32> to vector<1x128xf32>
    %41 = vector.extract_strided_slice %38 {offsets = [2, 0], sizes = [1, 128], strides = [1, 1]} : vector<8x128xf32> to vector<1x128xf32>
    %42 = vector.extract_strided_slice %38 {offsets = [3, 0], sizes = [1, 128], strides = [1, 1]} : vector<8x128xf32> to vector<1x128xf32>
    %c0_20 = arith.constant 0 : index
    %c0_21 = arith.constant 0 : index
    %43 = vector.load %arg3[%c0_20, %c0_21] : memref<528x128xf32, #tpu.memory_space<vmem>>, vector<8x128xf32>
    %cst_22 = arith.constant dense<0.000000e+00> : vector<2x128xf32>
    %44 = tpu.matmul %1, %43, %cst_22 {dimension_numbers = #tpu.dot_dimension_numbers<[1], [0], [0], [1], [0, 0, 1, 1], [], []>} : vector<2x8xf32>, vector<8x128xf32>, vector<2x128xf32> -> vector<2x128xf32>
    %45 = vector.broadcast %39 : vector<1x128xf32> to vector<2x128xf32>
    %46 = arith.addf %44, %45 : vector<2x128xf32>
    %cst_23 = arith.constant 0.000000e+00 : f32
    %47 = vector.broadcast %cst_23 : f32 to vector<2x128xf32>
    %48 = arith.maximumf %46, %47 : vector<2x128xf32>
    %c16_24 = arith.constant 16 : index
    %c0_25 = arith.constant 0 : index
    %49 = vector.load %arg3[%c16_24, %c0_25] : memref<528x128xf32, #tpu.memory_space<vmem>>, vector<128x128xf32>
    %cst_26 = arith.constant dense<0.000000e+00> : vector<2x128xf32>
    %50 = tpu.matmul %48, %49, %cst_26 {dimension_numbers = #tpu.dot_dimension_numbers<[1], [0], [0], [1], [0, 0, 1, 1], [], []>} : vector<2x128xf32>, vector<128x128xf32>, vector<2x128xf32> -> vector<2x128xf32>
    %51 = vector.broadcast %40 : vector<1x128xf32> to vector<2x128xf32>
    %52 = arith.addf %50, %51 : vector<2x128xf32>
    %c144 = arith.constant 144 : index
    %c0_27 = arith.constant 0 : index
    %53 = vector.load %arg3[%c144, %c0_27] : memref<528x128xf32, #tpu.memory_space<vmem>>, vector<128x128xf32>
    %cst_28 = arith.constant dense<0.000000e+00> : vector<2x128xf32>
    %54 = tpu.matmul %52, %53, %cst_28 {dimension_numbers = #tpu.dot_dimension_numbers<[1], [0], [0], [1], [0, 0, 1, 1], [], []>} : vector<2x128xf32>, vector<128x128xf32>, vector<2x128xf32> -> vector<2x128xf32>
    %c272 = arith.constant 272 : index
    %c0_29 = arith.constant 0 : index
    %55 = vector.load %arg3[%c272, %c0_29] : memref<528x128xf32, #tpu.memory_space<vmem>>, vector<128x128xf32>
    %cst_30 = arith.constant dense<0.000000e+00> : vector<2x128xf32>
    %56 = tpu.matmul %37, %55, %cst_30 {dimension_numbers = #tpu.dot_dimension_numbers<[1], [0], [0], [1], [0, 0, 1, 1], [], []>} : vector<2x128xf32>, vector<128x128xf32>, vector<2x128xf32> -> vector<2x128xf32>
    %57 = arith.addf %54, %56 : vector<2x128xf32>
    %58 = vector.broadcast %41 : vector<1x128xf32> to vector<2x128xf32>
    %59 = arith.addf %57, %58 : vector<2x128xf32>
    %cst_31 = arith.constant 0.000000e+00 : f32
    %60 = vector.broadcast %cst_31 : f32 to vector<2x128xf32>
    %61 = arith.maximumf %59, %60 : vector<2x128xf32>
    %c400 = arith.constant 400 : index
    %c0_32 = arith.constant 0 : index
    %62 = vector.load %arg3[%c400, %c0_32] : memref<528x128xf32, #tpu.memory_space<vmem>>, vector<128x128xf32>
    %cst_33 = arith.constant dense<0.000000e+00> : vector<2x128xf32>
    %63 = tpu.matmul %61, %62, %cst_33 {dimension_numbers = #tpu.dot_dimension_numbers<[1], [0], [0], [1], [0, 0, 1, 1], [], []>} : vector<2x128xf32>, vector<128x128xf32>, vector<2x128xf32> -> vector<2x128xf32>
    %64 = vector.broadcast %42 : vector<1x128xf32> to vector<2x128xf32>
    %65 = arith.addf %63, %64 : vector<2x128xf32>
    %c0_34 = arith.constant 0 : index
    %c0_35 = arith.constant 0 : index
    %66 = vector.load %arg4[%c0_34, %c0_35] : memref<2x128xf32, #tpu.memory_space<vmem>>, vector<2x128xf32>
    tpu.vector_store %arg4[%c0_34, %c0_35], %65 {strides = array<i32>} : memref<2x128xf32, #tpu.memory_space<vmem>>, vector<2x128xf32>,
    return
  }
}

</mosaic_0001>

<llo_original>
// kernel: pointnet_with_instance_info_forward.1
$region0: #{pointnet_with_instance_info_forward.1}
  #allocation0 [shape = 'u32[]', space=smem, size = 0x4, offset = 0x4, fixed_abs, tag = 'smem constant byte address 0x4 - core index']
  #allocation1 [shape = 'u32[144,128]{1,0:T(1,128)}', space=vmem, size = 0x12000, scoped, tag = 'internal scratch']
  %s0 = inlined_call_operand.vmem [shape: f32[128,5], index: 0, kind: input, shape index: {}]
  %s1 = inlined_call_operand.vmem [shape: f32[2,8], index: 1, kind: input, shape index: {}]
  %s2 = inlined_call_operand.hbm [shape: f32[288,128], index: 2, kind: input, shape index: {}]
  %s3 = inlined_call_operand.hbm [shape: f32[528,128], index: 3, kind: input, shape index: {}]
  %s4 = inlined_call_operand.hbm [shape: f32[2,128], index: 4, kind: output, shape index: {}]
  %s5 = sld [smem:[#allocation0]]
  $region34: #{pointnet_with_instance_info_forward.1} parent=0
    _
  %s7 = ssub.s32 1, %s5
  %s8 = scalar_select 0, %s7, %s5
  $region1: #{pointnet_with_instance_info_forward.1} parent=0
    #allocation2 [shape = 'u8[147456]{0}', space=vmem, size = 0x24000, scoped, tag = 'input window, operand 2, single buffered']
    #allocation3 [shape = 's32[1]{0}', space=sflag, size = 0x4, scoped, tag = 'scoped memory for pointnet_with_instance_info_forward.1']
    #allocation4 [shape = 's32[1]{0}', space=sflag, size = 0x4, scoped, tag = 'scoped memory for pointnet_with_instance_info_forward.1']
    #allocation5 [shape = 'u8[270336]{0}', space=vmem, size = 0x42000, scoped, tag = 'input window, operand 3, single buffered']
    #allocation6 [shape = 's32[1]{0}', space=sflag, size = 0x4, scoped, tag = 'scoped memory for pointnet_with_instance_info_forward.1']
    #allocation7 [shape = 'u8[1024]{0}', space=vmem, size = 0x400, scoped, tag = 'output window, operand 0, single buffered']
    %9 = vsyncpa [#allocation3], 0
    %10 = vsyncpa [#allocation6], 0
    %11 = vsyncpa [#allocation4], 0
    // Predicated region
    $region2: #{pointnet_with_instance_info_forward.1} parent=1 // pred_check
      _
    $region3: #{pointnet_with_instance_info_forward.1} parent=1 // pred_check_branch
      %13 = sbr.rel (0) target = $region5
    $region4: #{pointnet_with_instance_info_forward.1} parent=1 // pred_region
      _
    $region5: #{pointnet_with_instance_info_forward.1} parent=1 // pred_fallthru
      _
    // Predicated region
    $region6: #{pointnet_with_instance_info_forward.1} parent=1 // pred_check
      _
    $region7: #{pointnet_with_instance_info_forward.1} parent=1 // pred_check_branch
      %15 = sbr.rel (0) target = $region9
    $region8: #{pointnet_with_instance_info_forward.1} parent=1 // pred_region
      _
    $region9: #{pointnet_with_instance_info_forward.1} parent=1 // pred_fallthru
      _
    // Predicated region
    $region10: #{pointnet_with_instance_info_forward.1} parent=1 // pred_check
      _
    $region11: #{pointnet_with_instance_info_forward.1} parent=1 // pred_check_branch
      %17 = sbr.rel (0) target = $region13
    $region12: #{pointnet_with_instance_info_forward.1} parent=1 // pred_region
      %s19 = ssub.s32 4608, 4608
      %20 = vsyncadd [#allocation3], %s19
      %s21 = sshll.u32 [#allocation2], 4
      %s22 = int_to_ptr.vmem [resolvable:$true] %s21
      %27 = dma.hbm_to_vmem [thread:$0]  %s2, 4608, %s22, [#allocation3], 128, 128, 8
    $region13: #{pointnet_with_instance_info_forward.1} parent=1 // pred_fallthru
      _
    // Predicated region
    $region14: #{pointnet_with_instance_info_forward.1} parent=1 // pred_check
      _
    $region15: #{pointnet_with_instance_info_forward.1} parent=1 // pred_check_branch
      %29 = sbr.rel (0) target = $region17
    $region16: #{pointnet_with_instance_info_forward.1} parent=1 // pred_region
      %s31 = ssub.s32 8448, 8448
      %32 = vsyncadd [#allocation6], %s31
      %s33 = sshll.u32 [#allocation5], 4
      %s34 = int_to_ptr.vmem [resolvable:$true] %s33
      %39 = dma.hbm_to_vmem [thread:$0]  %s3, 8448, %s34, [#allocation6], 128, 128, 8
    $region17: #{pointnet_with_instance_info_forward.1} parent=1 // pred_fallthru
      _
    // Predicated region
    $region18: #{pointnet_with_instance_info_forward.1} parent=1 // pred_check
      _
    $region19: #{pointnet_with_instance_info_forward.1} parent=1 // pred_check_branch
      %41 = sbr.rel (0) target = $region21
    $region20: #{pointnet_with_instance_info_forward.1} parent=1 // pred_region
      %42 = dma.done [#allocation3], 4608
    $region21: #{pointnet_with_instance_info_forward.1} parent=1 // pred_fallthru
      _
    // Predicated region
    $region22: #{pointnet_with_instance_info_forward.1} parent=1 // pred_check
      _
    $region23: #{pointnet_with_instance_info_forward.1} parent=1 // pred_check_branch
      %44 = sbr.rel (0) target = $region25
    $region24: #{pointnet_with_instance_info_forward.1} parent=1 // pred_region
      %45 = dma.done [#allocation6], 8448
    $region25: #{pointnet_with_instance_info_forward.1} parent=1 // pred_fallthru
      _
    %v46 = vld [vmem:[%s0] sm:$0xff]
    %v47 = vld [vmem:[%s0 + $0x8] sm:$0xff]
    %v48 = vld [vmem:[%s0 + $0x10] sm:$0xff]
    %v49 = vld [vmem:[%s0 + $0x18] sm:$0xff]
    %v50 = vld [vmem:[%s0 + $0x20] sm:$0xff]
    %v51 = vld [vmem:[%s0 + $0x28] sm:$0xff]
    %v52 = vld [vmem:[%s0 + $0x30] sm:$0xff]
    %v53 = vld [vmem:[%s0 + $0x38] sm:$0xff]
    %v54 = vld [vmem:[%s0 + $0x40] sm:$0xff]
    %v55 = vld [vmem:[%s0 + $0x48] sm:$0xff]
    %v56 = vld [vmem:[%s0 + $0x50] sm:$0xff]
    %v57 = vld [vmem:[%s0 + $0x58] sm:$0xff]
    %v58 = vld [vmem:[%s0 + $0x60] sm:$0xff]
    %v59 = vld [vmem:[%s0 + $0x68] sm:$0xff]
    %v60 = vld [vmem:[%s0 + $0x70] sm:$0xff]
    %v61 = vld [vmem:[%s0 + $0x78] sm:$0xff]
    %v62 = vld [vmem:[%s1] sm:$0x3]
    %v63 = vld [vmem:[#allocation2 + $0x18] sm:$0xff]
    %v64 = vld [vmem:[#allocation2 + $0x8] sm:$0x1f]
    %vm65 = vcmask 39936
    %v67 = vsel %vm65, %v46, 0
    %v70 = vsel %vm65, %v47, 0
    %v73 = vsel %vm65, %v48, 0
    %v76 = vsel %vm65, %v49, 0
    %v79 = vsel %vm65, %v50, 0
    %v82 = vsel %vm65, %v51, 0
    %v85 = vsel %vm65, %v52, 0
    %v88 = vsel %vm65, %v53, 0
    %v91 = vsel %vm65, %v54, 0
    %v94 = vsel %vm65, %v55, 0
    %v97 = vsel %vm65, %v56, 0
    %v100 = vsel %vm65, %v57, 0
    %v103 = vsel %vm65, %v58, 0
    %v106 = vsel %vm65, %v59, 0
    %v109 = vsel %vm65, %v60, 0
    %v112 = vsel %vm65, %v61, 0
    %vm114 = vcmask 1044480
    %v116 = vsel %vm114, %v64, 0
    %118 = vmatprep.subr.mxu0 0.0
    %119 = vmatpush1.msra.mxu0 %v116
    %120 = vmatprep.subr.mxu0 0.0
    %121 = vmatpush1.msra.mxu0 0.0
    %122 = vmatprep.subr.mxu0 0.0
    %123 = vmatpush1.msra.mxu0 0.0
    %124 = vmatprep.subr.mxu0 0.0
    %125 = vmatpush1.msra.mxu0 0.0
    %126 = vmatprep.subr.mxu0 0.0
    %127 = vmatpush1.msra.mxu0 0.0
    %128 = vmatprep.subr.mxu0 0.0
    %129 = vmatpush1.msra.mxu0 0.0
    %130 = vmatprep.subr.mxu0 0.0
    %131 = vmatpush1.msra.mxu0 0.0
    %132 = vmatprep.subr.mxu0 0.0
    %133 = vmatpush1.msra.mxu0 0.0
    %134 = vmatprep.subr.mxu0 0.0
    %135 = vmatpush1.msra.mxu0 0.0
    %136 = vmatprep.subr.mxu0 0.0
    %137 = vmatpush1.msra.mxu0 0.0
    %138 = vmatprep.subr.mxu0 0.0
    %139 = vmatpush1.msra.mxu0 0.0
    %140 = vmatprep.subr.mxu0 0.0
    %141 = vmatpush1.msra.mxu0 0.0
    %142 = vmatprep.subr.mxu0 0.0
    %143 = vmatpush1.msra.mxu0 0.0
    %144 = vmatprep.subr.mxu0 0.0
    %145 = vmatpush1.msra.mxu0 0.0
    %146 = vmatprep.subr.mxu0 0.0
    %147 = vmatpush1.msra.mxu0 0.0
    %148 = vmatprep.subr.mxu0 0.0
    %149 = vmatpush1.msra.mxu0 0.0
    %150 = vmatprep.subr.mxu0 0.0
    %151 = vmatpush1.msra.mxu0 0.0
    %152 = vmatprep.subr.mxu0 0.0
    %153 = vmatpush1.msra.mxu0 0.0
    %154 = vmatprep.subr.mxu0 0.0
    %155 = vmatpush1.msra.mxu0 0.0
    %156 = vmatprep.subr.mxu0 0.0
    %157 = vmatpush1.msra.mxu0 0.0
    %158 = vmatprep.subr.mxu0 0.0
    %159 = vmatpush1.msra.mxu0 0.0
    %160 = vmatprep.subr.mxu0 0.0
    %161 = vmatpush1.msra.mxu0 0.0
    %162 = vmatprep.subr.mxu0 0.0
    %163 = vmatpush1.msra.mxu0 0.0
    %164 = vmatprep.subr.mxu0 0.0
    %165 = vmatpush1.msra.mxu0 0.0
    %166 = vmatprep.subr.mxu0 0.0
    %167 = vmatpush1.msra.mxu0 0.0
    %168 = vmatprep.subr.mxu0 0.0
    %169 = vmatpush1.msra.mxu0 0.0
    %170 = vmatprep.subr.mxu0 0.0
    %171 = vmatpush1.msra.mxu0 0.0
    %172 = vmatprep.subr.mxu0 0.0
    %173 = vmatpush1.msra.mxu0 0.0
    %174 = vmatprep.subr.mxu0 0.0
    %175 = vmatpush1.msra.mxu0 0.0
    %176 = vmatprep.subr.mxu0 0.0
    %177 = vmatpush1.msra.mxu0 0.0
    %178 = vmatprep.subr.mxu0 0.0
    %179 = vmatpush1.msra.mxu0 0.0
    %180 = vmatprep.subr.mxu0 0.0
    %181 = vmatpush1.msra.mxu0 0.0
    %182 = vmatprep.mubr.f32.mxu0 0.0
    %183 = vmatmul.mubr.f32.gmra.mrb[0].mxu0 %v67
    %v184 = vpop.f32.mrb[0].mxu0
    %v185 = vadd.f32 0.0, %v184
    %v186 = vpop.f32.mrb[0].mxu0
    %187 = vmatprep.mubr.f32.mxu0 0.0
    %188 = vmatmul.mubr.f32.gmra.mrb[0].mxu0 %v70
    %v189 = vpop.f32.mrb[0].mxu0
    %v190 = vadd.f32 0.0, %v189
    %v191 = vpop.f32.mrb[0].mxu0
    %192 = vmatprep.mubr.f32.mxu0 0.0
    %193 = vmatmul.mubr.f32.gmra.mrb[0].mxu0 %v73
    %v194 = vpop.f32.mrb[0].mxu0
    %v195 = vadd.f32 0.0, %v194
    %v196 = vpop.f32.mrb[0].mxu0
    %197 = vmatprep.mubr.f32.mxu0 0.0
    %198 = vmatmul.mubr.f32.gmra.mrb[0].mxu0 %v76
    %v199 = vpop.f32.mrb[0].mxu0
    %v200 = vadd.f32 0.0, %v199
    %v201 = vpop.f32.mrb[0].mxu0
    %202 = vmatprep.mubr.f32.mxu0 0.0
    %203 = vmatmul.mubr.f32.gmra.mrb[0].mxu0 %v79
    %v204 = vpop.f32.mrb[0].mxu0
    %v205 = vadd.f32 0.0, %v204
    %v206 = vpop.f32.mrb[0].mxu0
    %207 = vmatprep.mubr.f32.mxu0 0.0
    %208 = vmatmul.mubr.f32.gmra.mrb[0].mxu0 %v82
    %v209 = vpop.f32.mrb[0].mxu0
    %v210 = vadd.f32 0.0, %v209
    %v211 = vpop.f32.mrb[0].mxu0
    %212 = vmatprep.mubr.f32.mxu0 0.0
    %213 = vmatmul.mubr.f32.gmra.mrb[0].mxu0 %v85
    %v214 = vpop.f32.mrb[0].mxu0
    %v215 = vadd.f32 0.0, %v214
    %v216 = vpop.f32.mrb[0].mxu0
    %217 = vmatprep.mubr.f32.mxu0 0.0
    %218 = vmatmul.mubr.f32.gmra.mrb[0].mxu0 %v88
    %v219 = vpop.f32.mrb[0].mxu0
    %v220 = vadd.f32 0.0, %v219
    %v221 = vpop.f32.mrb[0].mxu0
    %222 = vmatprep.mubr.f32.mxu0 0.0
    %223 = vmatmul.mubr.f32.gmra.mrb[0].mxu0 %v91
    %v224 = vpop.f32.mrb[0].mxu0
    %v225 = vadd.f32 0.0, %v224
    %v226 = vpop.f32.mrb[0].mxu0
    %227 = vmatprep.mubr.f32.mxu0 0.0
    %228 = vmatmul.mubr.f32.gmra.mrb[0].mxu0 %v94
    %v229 = vpop.f32.mrb[0].mxu0
    %v230 = vadd.f32 0.0, %v229
    %v231 = vpop.f32.mrb[0].mxu0
    %232 = vmatprep.mubr.f32.mxu0 0.0
    %233 = vmatmul.mubr.f32.gmra.mrb[0].mxu0 %v97
    %v234 = vpop.f32.mrb[0].mxu0
    %v235 = vadd.f32 0.0, %v234
    %v236 = vpop.f32.mrb[0].mxu0
    %237 = vmatprep.mubr.f32.mxu0 0.0
    %238 = vmatmul.mubr.f32.gmra.mrb[0].mxu0 %v100
    %v239 = vpop.f32.mrb[0].mxu0
    %v240 = vadd.f32 0.0, %v239
    %v241 = vpop.f32.mrb[0].mxu0
    %242 = vmatprep.mubr.f32.mxu0 0.0
    %243 = vmatmul.mubr.f32.gmra.mrb[0].mxu0 %v103
    %v244 = vpop.f32.mrb[0].mxu0
    %v245 = vadd.f32 0.0, %v244
    %v246 = vpop.f32.mrb[0].mxu0
    %247 = vmatprep.mubr.f32.mxu0 0.0
    %248 = vmatmul.mubr.f32.gmra.mrb[0].mxu0 %v106
    %v249 = vpop.f32.mrb[0].mxu0
    %v250 = vadd.f32 0.0, %v249
    %v251 = vpop.f32.mrb[0].mxu0
    %252 = vmatprep.mubr.f32.mxu0 0.0
    %253 = vmatmul.mubr.f32.gmra.mrb[0].mxu0 %v109
    %v254 = vpop.f32.mrb[0].mxu0
    %v255 = vadd.f32 0.0, %v254
    %v256 = vpop.f32.mrb[0].mxu0
    %257 = vmatprep.mubr.f32.mxu0 0.0
    %258 = vmatmul.mubr.f32.gmra.mrb[0].mxu0 %v112
    %v259 = vpop.f32.mrb[0].mxu0
    %v260 = vadd.f32 0.0, %v259
    %v261 = vpop.f32.mrb[0].mxu0
    %262 = vdwg.mxu0
    %v263 = vlaneseq
    %v264 = vshrl.u32 %v263, 7
    %v265 = vsub.s32 1, %v264
    %v266 = vrot.slane %v63, %v265
    %vm267 = vcmp.gt.f32.partialorder %v185, %v266
    %vm268 = vcmp.gt.f32.partialorder %v190, %v266
    %vm269 = vcmp.gt.f32.partialorder %v195, %v266
    %vm270 = vcmp.gt.f32.partialorder %v200, %v266
    %vm271 = vcmp.gt.f32.partialorder %v205, %v266
    %vm272 = vcmp.gt.f32.partialorder %v210, %v266
    %vm273 = vcmp.gt.f32.partialorder %v215, %v266
    %vm274 = vcmp.gt.f32.partialorder %v220, %v266
    %vm275 = vcmp.gt.f32.partialorder %v225, %v266
    %vm276 = vcmp.gt.f32.partialorder %v230, %v266
    %vm277 = vcmp.gt.f32.partialorder %v235, %v266
    %vm278 = vcmp.gt.f32.partialorder %v240, %v266
    %vm279 = vcmp.gt.f32.partialorder %v245, %v266
    %vm280 = vcmp.gt.f32.partialorder %v250, %v266
    %vm281 = vcmp.gt.f32.partialorder %v255, %v266
    %vm282 = vcmp.gt.f32.partialorder %v260, %v266
    %v283 = vld [vmem:[#allocation2] sm:$0x1f]
    %v285 = vsel %vm114, %v283, 0
    %287 = vmatprep.subr.mxu0 0.0
    %288 = vmatpush1.msra.mxu0 %v285
    %289 = vmatprep.subr.mxu0 0.0
    %290 = vmatpush1.msra.mxu0 0.0
    %291 = vmatprep.subr.mxu0 0.0
    %292 = vmatpush1.msra.mxu0 0.0
    %293 = vmatprep.subr.mxu0 0.0
    %294 = vmatpush1.msra.mxu0 0.0
    %295 = vmatprep.subr.mxu0 0.0
    %296 = vmatpush1.msra.mxu0 0.0
    %297 = vmatprep.subr.mxu0 0.0
    %298 = vmatpush1.msra.mxu0 0.0
    %299 = vmatprep.subr.mxu0 0.0
    %300 = vmatpush1.msra.mxu0 0.0
    %301 = vmatprep.subr.mxu0 0.0
    %302 = vmatpush1.msra.mxu0 0.0
    %303 = vmatprep.subr.mxu0 0.0
    %304 = vmatpush1.msra.mxu0 0.0
    %305 = vmatprep.subr.mxu0 0.0
    %306 = vmatpush1.msra.mxu0 0.0
    %307 = vmatprep.subr.mxu0 0.0
    %308 = vmatpush1.msra.mxu0 0.0
    %309 = vmatprep.subr.mxu0 0.0
    %310 = vmatpush1.msra.mxu0 0.0
    %311 = vmatprep.subr.mxu0 0.0
    %312 = vmatpush1.msra.mxu0 0.0
    %313 = vmatprep.subr.mxu0 0.0
    %314 = vmatpush1.msra.mxu0 0.0
    %315 = vmatprep.subr.mxu0 0.0
    %316 = vmatpush1.msra.mxu0 0.0
    %317 = vmatprep.subr.mxu0 0.0
    %318 = vmatpush1.msra.mxu0 0.0
    %319 = vmatprep.subr.mxu0 0.0
    %320 = vmatpush1.msra.mxu0 0.0
    %321 = vmatprep.subr.mxu0 0.0
    %322 = vmatpush1.msra.mxu0 0.0
    %323 = vmatprep.subr.mxu0 0.0
    %324 = vmatpush1.msra.mxu0 0.0
    %325 = vmatprep.subr.mxu0 0.0
    %326 = vmatpush1.msra.mxu0 0.0
    %327 = vmatprep.subr.mxu0 0.0
    %328 = vmatpush1.msra.mxu0 0.0
    %329 = vmatprep.subr.mxu0 0.0
    %330 = vmatpush1.msra.mxu0 0.0
    %331 = vmatprep.subr.mxu0 0.0
    %332 = vmatpush1.msra.mxu0 0.0
    %333 = vmatprep.subr.mxu0 0.0
    %334 = vmatpush1.msra.mxu0 0.0
    %335 = vmatprep.subr.mxu0 0.0
    %336 = vmatpush1.msra.mxu0 0.0
    %337 = vmatprep.subr.mxu0 0.0
    %338 = vmatpush1.msra.mxu0 0.0
    %339 = vmatprep.subr.mxu0 0.0
    %340 = vmatpush1.msra.mxu0 0.0
    %341 = vmatprep.subr.mxu0 0.0
    %342 = vmatpush1.msra.mxu0 0.0
    %343 = vmatprep.subr.mxu0 0.0
    %344 = vmatpush1.msra.mxu0 0.0
    %345 = vmatprep.subr.mxu0 0.0
    %346 = vmatpush1.msra.mxu0 0.0
    %347 = vmatprep.subr.mxu0 0.0
    %348 = vmatpush1.msra.mxu0 0.0
    %349 = vmatprep.subr.mxu0 0.0
    %350 = vmatpush1.msra.mxu0 0.0
    %351 = vmatprep.mubr.f32.mxu0 0.0
    %352 = vmatmul.mubr.f32.gmra.mrb[0].mxu0 %v67
    %v353 = vpop.f32.mrb[0].mxu0
    %v354 = vadd.f32 0.0, %v353
    %v355 = vpop.f32.mrb[0].mxu0
    %356 = vmatprep.mubr.f32.mxu0 0.0
    %357 = vmatmul.mubr.f32.gmra.mrb[0].mxu0 %v70
    %v358 = vpop.f32.mrb[0].mxu0
    %v359 = vadd.f32 0.0, %v358
    %v360 = vpop.f32.mrb[0].mxu0
    %361 = vmatprep.mubr.f32.mxu0 0.0
    %362 = vmatmul.mubr.f32.gmra.mrb[0].mxu0 %v73
    %v363 = vpop.f32.mrb[0].mxu0
    %v364 = vadd.f32 0.0, %v363
    %v365 = vpop.f32.mrb[0].mxu0
    %366 = vmatprep.mubr.f32.mxu0 0.0
    %367 = vmatmul.mubr.f32.gmra.mrb[0].mxu0 %v76
    %v368 = vpop.f32.mrb[0].mxu0
    %v369 = vadd.f32 0.0, %v368
    %v370 = vpop.f32.mrb[0].mxu0
    %371 = vmatprep.mubr.f32.mxu0 0.0
    %372 = vmatmul.mubr.f32.gmra.mrb[0].mxu0 %v79
    %v373 = vpop.f32.mrb[0].mxu0
    %v374 = vadd.f32 0.0, %v373
    %v375 = vpop.f32.mrb[0].mxu0
    %376 = vmatprep.mubr.f32.mxu0 0.0
    %377 = vmatmul.mubr.f32.gmra.mrb[0].mxu0 %v82
    %v378 = vpop.f32.mrb[0].mxu0
    %v379 = vadd.f32 0.0, %v378
    %v380 = vpop.f32.mrb[0].mxu0
    %381 = vmatprep.mubr.f32.mxu0 0.0
    %382 = vmatmul.mubr.f32.gmra.mrb[0].mxu0 %v85
    %v383 = vpop.f32.mrb[0].mxu0
    %v384 = vadd.f32 0.0, %v383
    %v385 = vpop.f32.mrb[0].mxu0
    %386 = vmatprep.mubr.f32.mxu0 0.0
    %387 = vmatmul.mubr.f32.gmra.mrb[0].mxu0 %v88
    %v388 = vpop.f32.mrb[0].mxu0
    %v389 = vadd.f32 0.0, %v388
    %v390 = vpop.f32.mrb[0].mxu0
    %391 = vmatprep.mubr.f32.mxu0 0.0
    %392 = vmatmul.mubr.f32.gmra.mrb[0].mxu0 %v91
    %v393 = vpop.f32.mrb[0].mxu0
    %v394 = vadd.f32 0.0, %v393
    %v395 = vpop.f32.mrb[0].mxu0
    %396 = vmatprep.mubr.f32.mxu0 0.0
    %397 = vmatmul.mubr.f32.gmra.mrb[0].mxu0 %v94
    %v398 = vpop.f32.mrb[0].mxu0
    %v399 = vadd.f32 0.0, %v398
    %v400 = vpop.f32.mrb[0].mxu0
    %401 = vmatprep.mubr.f32.mxu0 0.0
    %402 = vmatmul.mubr.f32.gmra.mrb[0].mxu0 %v97
    %v403 = vpop.f32.mrb[0].mxu0
    %v404 = vadd.f32 0.0, %v403
    %v405 = vpop.f32.mrb[0].mxu0
    %406 = vmatprep.mubr.f32.mxu0 0.0
    %407 = vmatmul.mubr.f32.gmra.mrb[0].mxu0 %v100
    %v408 = vpop.f32.mrb[0].mxu0
    %v409 = vadd.f32 0.0, %v408
    %v410 = vpop.f32.mrb[0].mxu0
    %411 = vmatprep.mubr.f32.mxu0 0.0
    %412 = vmatmul.mubr.f32.gmra.mrb[0].mxu0 %v103
    %v413 = vpop.f32.mrb[0].mxu0
    %v414 = vadd.f32 0.0, %v413
    %v415 = vpop.f32.mrb[0].mxu0
    %416 = vmatprep.mubr.f32.mxu0 0.0
    %417 = vmatmul.mubr.f32.gmra.mrb[0].mxu0 %v106
    %v418 = vpop.f32.mrb[0].mxu0
    %v419 = vadd.f32 0.0, %v418
    %v420 = vpop.f32.mrb[0].mxu0
    %421 = vmatprep.mubr.f32.mxu0 0.0
    %422 = vmatmul.mubr.f32.gmra.mrb[0].mxu0 %v109
    %v423 = vpop.f32.mrb[0].mxu0
    %v424 = vadd.f32 0.0, %v423
    %v425 = vpop.f32.mrb[0].mxu0
    %426 = vmatprep.mubr.f32.mxu0 0.0
    %427 = vmatmul.mubr.f32.gmra.mrb[0].mxu0 %v112
    %v428 = vpop.f32.mrb[0].mxu0
    %v429 = vadd.f32 0.0, %v428
    %v430 = vpop.f32.mrb[0].mxu0
    %431 = vdwg.mxu0
    %v432 = vld [vmem:[#allocation2 + $0x10] sm:$0xff]
    %v433 = vlaneseq
    %v434 = vshrl.u32 %v433, 7
    %v435 = vsub.s32 0, %v434
    %v436 = vrot.slane %v63, %v435
    %vm437 = vcmask 64512
    %v439 = vsel %vm437, %v62, 0
    %441 = vmatprep.subr.mxu0 0.0
    %442 = vmatpush1.msra.mxu0 %v432
    %443 = vmatprep.subr.mxu0 0.0
    %444 = vmatpush1.msra.mxu0 0.0
    %445 = vmatprep.subr.mxu0 0.0
    %446 = vmatpush1.msra.mxu0 0.0
    %447 = vmatprep.subr.mxu0 0.0
    %448 = vmatpush1.msra.mxu0 0.0
    %449 = vmatprep.subr.mxu0 0.0
    %450 = vmatpush1.msra.mxu0 0.0
    %451 = vmatprep.subr.mxu0 0.0
    %452 = vmatpush1.msra.mxu0 0.0
    %453 = vmatprep.subr.mxu0 0.0
    %454 = vmatpush1.msra.mxu0 0.0
    %455 = vmatprep.subr.mxu0 0.0
    %456 = vmatpush1.msra.mxu0 0.0
    %457 = vmatprep.subr.mxu0 0.0
    %458 = vmatpush1.msra.mxu0 0.0
    %459 = vmatprep.subr.mxu0 0.0
    %460 = vmatpush1.msra.mxu0 0.0
    %461 = vmatprep.subr.mxu0 0.0
    %462 = vmatpush1.msra.mxu0 0.0
    %463 = vmatprep.subr.mxu0 0.0
    %464 = vmatpush1.msra.mxu0 0.0
    %465 = vmatprep.subr.mxu0 0.0
    %466 = vmatpush1.msra.mxu0 0.0
    %467 = vmatprep.subr.mxu0 0.0
    %468 = vmatpush1.msra.mxu0 0.0
    %469 = vmatprep.subr.mxu0 0.0
    %470 = vmatpush1.msra.mxu0 0.0
    %471 = vmatprep.subr.mxu0 0.0
    %472 = vmatpush1.msra.mxu0 0.0
    %473 = vmatprep.subr.mxu0 0.0
    %474 = vmatpush1.msra.mxu0 0.0
    %475 = vmatprep.subr.mxu0 0.0
    %476 = vmatpush1.msra.mxu0 0.0
    %477 = vmatprep.subr.mxu0 0.0
    %478 = vmatpush1.msra.mxu0 0.0
    %479 = vmatprep.subr.mxu0 0.0
    %480 = vmatpush1.msra.mxu0 0.0
    %481 = vmatprep.subr.mxu0 0.0
    %482 = vmatpush1.msra.mxu0 0.0
    %483 = vmatprep.subr.mxu0 0.0
    %484 = vmatpush1.msra.mxu0 0.0
    %485 = vmatprep.subr.mxu0 0.0
    %486 = vmatpush1.msra.mxu0 0.0
    %487 = vmatprep.subr.mxu0 0.0
    %488 = vmatpush1.msra.mxu0 0.0
    %489 = vmatprep.subr.mxu0 0.0
    %490 = vmatpush1.msra.mxu0 0.0
    %491 = vmatprep.subr.mxu0 0.0
    %492 = vmatpush1.msra.mxu0 0.0
    %493 = vmatprep.subr.mxu0 0.0
    %494 = vmatpush1.msra.mxu0 0.0
    %495 = vmatprep.subr.mxu0 0.0
    %496 = vmatpush1.msra.mxu0 0.0
    %497 = vmatprep.subr.mxu0 0.0
    %498 = vmatpush1.msra.mxu0 0.0
    %499 = vmatprep.subr.mxu0 0.0
    %500 = vmatpush1.msra.mxu0 0.0
    %501 = vmatprep.subr.mxu0 0.0
    %502 = vmatpush1.msra.mxu0 0.0
    %503 = vmatprep.subr.mxu0 0.0
    %504 = vmatpush1.msra.mxu0 0.0
    %505 = vmatprep.mubr.f32.mxu0 0.0
    %506 = vmatmul.mubr.f32.gmra.mrb[0].mxu0 %v439
    %v507 = vpop.f32.mrb[0].mxu0
    %v508 = vadd.f32 %v436, %v507
    %v509 = vpop.f32.mrb[0].mxu0
    %510 = vdwg.mxu0
    %v513 = vunpack.c.l.s4 1966171168
    %v514 = vunpack.c.0.s8 %v513
    %v515 = vlaneseq
    %v516 = vshrl.u32 %v515, 7
    %v517 = vsub.s32 %v514, %v516
    %v518 = vrot.slane %v508, %v517
    %v519 = vcombine.high %v518, %v518
    %v521 = vunpack.c.l.s4 1966171168
    %v522 = vunpack.c.0.s8 %v521
    %v523 = vlaneseq
    %v524 = vshrl.u32 %v523, 7
    %v525 = vsub.s32 %v522, %v524
    %v526 = vrot.slane %v518, %v525
    %v528 = vunpack.c.l.s4 1966171168
    %v529 = vunpack.c.0.s8 %v528
    %v530 = vlaneseq
    %v531 = vshrl.u32 %v530, 7
    %v532 = vsub.s32 %v529, %v531
    %v533 = vrot.slane %v519, %v532
    %v534 = vlaneseq
    %v535 = vshrl.u32 %v534, 7
    %v536 = vsub.s32 0, %v535
    %v537 = vrot.slane %v526, %v536
    %v538 = vlaneseq
    %v539 = vshrl.u32 %v538, 7
    %v540 = vsub.s32 0, %v539
    %v541 = vrot.slane %v533, %v540
    %v544 = vadd.f32 %v354, %v537
    %v545 = vadd.f32 %v359, %v537
    %v546 = vadd.f32 %v364, %v537
    %v547 = vadd.f32 %v369, %v537
    %v548 = vadd.f32 %v374, %v537
    %v549 = vadd.f32 %v379, %v537
    %v550 = vadd.f32 %v384, %v537
    %v551 = vadd.f32 %v389, %v537
    %v552 = vadd.f32 %v394, %v541
    %v553 = vadd.f32 %v399, %v541
    %v554 = vadd.f32 %v404, %v541
    %v555 = vadd.f32 %v409, %v541
    %v556 = vadd.f32 %v414, %v541
    %v557 = vadd.f32 %v419, %v541
    %v558 = vadd.f32 %v424, %v541
    %v559 = vadd.f32 %v429, %v541
    %v560 = vmax.f32 %v544, 0.0
    %v561 = vmax.f32 %v545, 0.0
    %v562 = vmax.f32 %v546, 0.0
    %v563 = vmax.f32 %v547, 0.0
    %v564 = vmax.f32 %v548, 0.0
    %v565 = vmax.f32 %v549, 0.0
    %v566 = vmax.f32 %v550, 0.0
    %v567 = vmax.f32 %v551, 0.0
    %v568 = vmax.f32 %v552, 0.0
    %v569 = vmax.f32 %v553, 0.0
    %v570 = vmax.f32 %v554, 0.0
    %v571 = vmax.f32 %v555, 0.0
    %v572 = vmax.f32 %v556, 0.0
    %v573 = vmax.f32 %v557, 0.0
    %v574 = vmax.f32 %v558, 0.0
    %v575 = vmax.f32 %v559, 0.0
    %v576 = vld [vmem:[#allocation2 + $0x20] sm:$0xff]
    %v577 = vld [vmem:[#allocation2 + $0x28] sm:$0xff]
    %v578 = vld [vmem:[#allocation2 + $0x30] sm:$0xff]
    %v579 = vld [vmem:[#allocation2 + $0x38] sm:$0xff]
    %v580 = vld [vmem:[#allocation2 + $0x40] sm:$0xff]
    %v581 = vld [vmem:[#allocation2 + $0x48] sm:$0xff]
    %v582 = vld [vmem:[#allocation2 + $0x50] sm:$0xff]
    %v583 = vld [vmem:[#allocation2 + $0x58] sm:$0xff]
    %v584 = vld [vmem:[#allocation2 + $0x60] sm:$0xff]
    %v585 = vld [vmem:[#allocation2 + $0x68] sm:$0xff]
    %v586 = vld [vmem:[#allocation2 + $0x70] sm:$0xff]
    %v587 = vld [vmem:[#allocation2 + $0x78] sm:$0xff]
    %v588 = vld [vmem:[#allocation2 + $0x80] sm:$0xff]
    %v589 = vld [vmem:[#allocation2 + $0x88] sm:$0xff]
    %v590 = vld [vmem:[#allocation2 + $0x90] sm:$0xff]
    %v591 = vld [vmem:[#allocation2 + $0x98] sm:$0xff]
    %v592 = vlaneseq
    %v593 = vshrl.u32 %v592, 7
    %v594 = vsub.s32 2, %v593
    %v595 = vrot.slane %v63, %v594
    %596 = vmatprep.subr.mxu0 0.0
    %597 = vmatpush1.msra.mxu0 %v576
    %598 = vmatprep.subr.mxu0 0.0
    %599 = vmatpush1.msra.mxu0 %v577
    %600 = vmatprep.subr.mxu0 0.0
    %601 = vmatpush1.msra.mxu0 %v578
    %602 = vmatprep.subr.mxu0 0.0
    %603 = vmatpush1.msra.mxu0 %v579
    %604 = vmatprep.subr.mxu0 0.0
    %605 = vmatpush1.msra.mxu0 %v580
    %606 = vmatprep.subr.mxu0 0.0
    %607 = vmatpush1.msra.mxu0 %v581
    %608 = vmatprep.subr.mxu0 0.0
    %609 = vmatpush1.msra.mxu0 %v582
    %610 = vmatprep.subr.mxu0 0.0
    %611 = vmatpush1.msra.mxu0 %v583
    %612 = vmatprep.subr.mxu0 0.0
    %613 = vmatpush1.msra.mxu0 %v584
    %614 = vmatprep.subr.mxu0 0.0
    %615 = vmatpush1.msra.mxu0 %v585
    %616 = vmatprep.subr.mxu0 0.0
    %617 = vmatpush1.msra.mxu0 %v586
    %618 = vmatprep.subr.mxu0 0.0
    %619 = vmatpush1.msra.mxu0 %v587
    %620 = vmatprep.subr.mxu0 0.0
    %621 = vmatpush1.msra.mxu0 %v588
    %622 = vmatprep.subr.mxu0 0.0
    %623 = vmatpush1.msra.mxu0 %v589
    %624 = vmatprep.subr.mxu0 0.0
    %625 = vmatpush1.msra.mxu0 %v590
    %626 = vmatprep.subr.mxu0 0.0
    %627 = vmatpush1.msra.mxu0 %v591
    %628 = vmatprep.subr.mxu0 0.0
    %629 = vmatpush1.msra.mxu0 0.0
    %630 = vmatprep.subr.mxu0 0.0
    %631 = vmatpush1.msra.mxu0 0.0
    %632 = vmatprep.subr.mxu0 0.0
    %633 = vmatpush1.msra.mxu0 0.0
    %634 = vmatprep.subr.mxu0 0.0
    %635 = vmatpush1.msra.mxu0 0.0
    %636 = vmatprep.subr.mxu0 0.0
    %637 = vmatpush1.msra.mxu0 0.0
    %638 = vmatprep.subr.mxu0 0.0
    %639 = vmatpush1.msra.mxu0 0.0
    %640 = vmatprep.subr.mxu0 0.0
    %641 = vmatpush1.msra.mxu0 0.0
    %642 = vmatprep.subr.mxu0 0.0
    %643 = vmatpush1.msra.mxu0 0.0
    %644 = vmatprep.subr.mxu0 0.0
    %645 = vmatpush1.msra.mxu0 0.0
    %646 = vmatprep.subr.mxu0 0.0
    %647 = vmatpush1.msra.mxu0 0.0
    %648 = vmatprep.subr.mxu0 0.0
    %649 = vmatpush1.msra.mxu0 0.0
    %650 = vmatprep.subr.mxu0 0.0
    %651 = vmatpush1.msra.mxu0 0.0
    %652 = vmatprep.subr.mxu0 0.0
    %653 = vmatpush1.msra.mxu0 0.0
    %654 = vmatprep.subr.mxu0 0.0
    %655 = vmatpush1.msra.mxu0 0.0
    %656 = vmatprep.subr.mxu0 0.0
    %657 = vmatpush1.msra.mxu0 0.0
    %658 = vmatprep.subr.mxu0 0.0
    %659 = vmatpush1.msra.mxu0 0.0
    %660 = vmatprep.mubr.f32.mxu0 0.0
    %661 = vmatmul.mubr.f32.gmra.mrb[0].mxu0 %v560
    %v662 = vpop.f32.mrb[0].mxu0
    %v663 = vadd.f32 %v595, %v662
    %v664 = vpop.f32.mrb[0].mxu0
    %665 = vmatprep.mubr.f32.mxu0 0.0
    %666 = vmatmul.mubr.f32.gmra.mrb[0].mxu0 %v561
    %v667 = vpop.f32.mrb[0].mxu0
    %v668 = vadd.f32 %v595, %v667
    %v669 = vpop.f32.mrb[0].mxu0
    %670 = vmatprep.mubr.f32.mxu0 0.0
    %671 = vmatmul.mubr.f32.gmra.mrb[0].mxu0 %v562
    %v672 = vpop.f32.mrb[0].mxu0
    %v673 = vadd.f32 %v595, %v672
    %v674 = vpop.f32.mrb[0].mxu0
    %675 = vmatprep.mubr.f32.mxu0 0.0
    %676 = vmatmul.mubr.f32.gmra.mrb[0].mxu0 %v563
    %v677 = vpop.f32.mrb[0].mxu0
    %v678 = vadd.f32 %v595, %v677
    %v679 = vpop.f32.mrb[0].mxu0
    %680 = vmatprep.mubr.f32.mxu0 0.0
    %681 = vmatmul.mubr.f32.gmra.mrb[0].mxu0 %v564
    %v682 = vpop.f32.mrb[0].mxu0
    %v683 = vadd.f32 %v595, %v682
    %v684 = vpop.f32.mrb[0].mxu0
    %685 = vmatprep.mubr.f32.mxu0 0.0
    %686 = vmatmul.mubr.f32.gmra.mrb[0].mxu0 %v565
    %v687 = vpop.f32.mrb[0].mxu0
    %v688 = vadd.f32 %v595, %v687
    %v689 = vpop.f32.mrb[0].mxu0
    %690 = vmatprep.mubr.f32.mxu0 0.0
    %691 = vmatmul.mubr.f32.gmra.mrb[0].mxu0 %v566
    %v692 = vpop.f32.mrb[0].mxu0
    %v693 = vadd.f32 %v595, %v692
    %v694 = vpop.f32.mrb[0].mxu0
    %695 = vmatprep.mubr.f32.mxu0 0.0
    %696 = vmatmul.mubr.f32.gmra.mrb[0].mxu0 %v567
    %v697 = vpop.f32.mrb[0].mxu0
    %v698 = vadd.f32 %v595, %v697
    %v699 = vpop.f32.mrb[0].mxu0
    %700 = vmatprep.mubr.f32.mxu0 0.0
    %701 = vmatmul.mubr.f32.gmra.mrb[0].mxu0 %v568
    %v702 = vpop.f32.mrb[0].mxu0
    %v703 = vadd.f32 %v595, %v702
    %v704 = vpop.f32.mrb[0].mxu0
    %705 = vmatprep.mubr.f32.mxu0 0.0
    %706 = vmatmul.mubr.f32.gmra.mrb[0].mxu0 %v569
    %v707 = vpop.f32.mrb[0].mxu0
    %v708 = vadd.f32 %v595, %v707
    %v709 = vpop.f32.mrb[0].mxu0
    %710 = vmatprep.mubr.f32.mxu0 0.0
    %711 = vmatmul.mubr.f32.gmra.mrb[0].mxu0 %v570
    %v712 = vpop.f32.mrb[0].mxu0
    %v713 = vadd.f32 %v595, %v712
    %v714 = vpop.f32.mrb[0].mxu0
    %715 = vmatprep.mubr.f32.mxu0 0.0
    %716 = vmatmul.mubr.f32.gmra.mrb[0].mxu0 %v571
    %v717 = vpop.f32.mrb[0].mxu0
    %v718 = vadd.f32 %v595, %v717
    %v719 = vpop.f32.mrb[0].mxu0
    %720 = vmatprep.mubr.f32.mxu0 0.0
    %721 = vmatmul.mubr.f32.gmra.mrb[0].mxu0 %v572
    %v722 = vpop.f32.mrb[0].mxu0
    %v723 = vadd.f32 %v595, %v722
    %v724 = vpop.f32.mrb[0].mxu0
    %725 = vmatprep.mubr.f32.mxu0 0.0
    %726 = vmatmul.mubr.f32.gmra.mrb[0].mxu0 %v573
    %v727 = vpop.f32.mrb[0].mxu0
    %v728 = vadd.f32 %v595, %v727
    %v729 = vpop.f32.mrb[0].mxu0
    %730 = vmatprep.mubr.f32.mxu0 0.0
    %731 = vmatmul.mubr.f32.gmra.mrb[0].mxu0 %v574
    %v732 = vpop.f32.mrb[0].mxu0
    %v733 = vadd.f32 %v595, %v732
    %v734 = vpop.f32.mrb[0].mxu0
    %735 = vmatprep.mubr.f32.mxu0 0.0
    %736 = vmatmul.mubr.f32.gmra.mrb[0].mxu0 %v575
    %v737 = vpop.f32.mrb[0].mxu0
    %v738 = vadd.f32 %v595, %v737
    %v739 = vpop.f32.mrb[0].mxu0
    %740 = vdwg.mxu0
    %v741 = vmax.f32 %v663, 0.0
    %v742 = vmax.f32 %v668, 0.0
    %v743 = vmax.f32 %v673, 0.0
    %v744 = vmax.f32 %v678, 0.0
    %v745 = vmax.f32 %v683, 0.0
    %v746 = vmax.f32 %v688, 0.0
    %v747 = vmax.f32 %v693, 0.0
    %v748 = vmax.f32 %v698, 0.0
    %v749 = vmax.f32 %v703, 0.0
    %v750 = vmax.f32 %v708, 0.0
    %v751 = vmax.f32 %v713, 0.0
    %v752 = vmax.f32 %v718, 0.0
    %v753 = vmax.f32 %v723, 0.0
    %v754 = vmax.f32 %v728, 0.0
    %v755 = vmax.f32 %v733, 0.0
    %v756 = vmax.f32 %v738, 0.0
    %v757 = vsel %vm267, %v741, -1e+10
    %v758 = vsel %vm268, %v742, -1e+10
    %v759 = vsel %vm269, %v743, -1e+10
    %v760 = vsel %vm270, %v744, -1e+10
    %v761 = vsel %vm271, %v745, -1e+10
    %v762 = vsel %vm272, %v746, -1e+10
    %v763 = vsel %vm273, %v747, -1e+10
    %v764 = vsel %vm274, %v748, -1e+10
    %v765 = vsel %vm275, %v749, -1e+10
    %v766 = vsel %vm276, %v750, -1e+10
    %v767 = vsel %vm277, %v751, -1e+10
    %v768 = vsel %vm278, %v752, -1e+10
    %v769 = vsel %vm279, %v753, -1e+10
    %v770 = vsel %vm280, %v754, -1e+10
    %v771 = vsel %vm281, %v755, -1e+10
    %v772 = vsel %vm282, %v756, -1e+10
    %v773 = vmax.f32 %v757, %v759
    %v774 = vmax.f32 %v758, %v760
    %v775 = vmax.f32 %v773, %v761
    %v776 = vmax.f32 %v774, %v762
    %v777 = vmax.f32 %v775, %v763
    %v778 = vmax.f32 %v776, %v764
    %v779 = vmax.f32 %v777, %v778
    %v780 = vrot.slane %v779, 4
    %v781 = vmax.f32 %v779, %v780
    %v782 = vrot.slane %v781, 2
    %v783 = vmax.f32 %v781, %v782
    %v784 = vrot.slane %v783, 1
    %v785 = vmax.f32 %v783, %v784
    %v786 = vmax.f32 %v765, %v767
    %v787 = vmax.f32 %v766, %v768
    %v788 = vmax.f32 %v786, %v769
    %v789 = vmax.f32 %v787, %v770
    %v790 = vmax.f32 %v788, %v771
    %v791 = vmax.f32 %v789, %v772
    %v792 = vmax.f32 %v790, %v791
    %v793 = vrot.slane %v792, 4
    %v794 = vmax.f32 %v792, %v793
    %v795 = vrot.slane %v794, 2
    %v796 = vmax.f32 %v794, %v795
    %v797 = vrot.slane %v796, 1
    %v798 = vmax.f32 %v796, %v797
    %v799 = vld [vmem:[#allocation2 + $0xa0] sm:$0xff]
    %v800 = vld [vmem:[#allocation2 + $0xa8] sm:$0xff]
    %v801 = vld [vmem:[#allocation2 + $0xb0] sm:$0xff]
    %v802 = vld [vmem:[#allocation2 + $0xb8] sm:$0xff]
    %v803 = vld [vmem:[#allocation2 + $0xc0] sm:$0xff]
    %v804 = vld [vmem:[#allocation2 + $0xc8] sm:$0xff]
    %v805 = vld [vmem:[#allocation2 + $0xd0] sm:$0xff]
    %v806 = vld [vmem:[#allocation2 + $0xd8] sm:$0xff]
    %v807 = vld [vmem:[#allocation2 + $0xe0] sm:$0xff]
    %v808 = vld [vmem:[#allocation2 + $0xe8] sm:$0xff]
    %v809 = vld [vmem:[#allocation2 + $0xf0] sm:$0xff]
    %v810 = vld [vmem:[#allocation2 + $0xf8] sm:$0xff]
    %v811 = vld [vmem:[#allocation2 + $0x100] sm:$0xff]
    %v812 = vld [vmem:[#allocation2 + $0x108] sm:$0xff]
    %v813 = vld [vmem:[#allocation2 + $0x110] sm:$0xff]
    %v814 = vld [vmem:[#allocation2 + $0x118] sm:$0xff]
    %v815 = vlaneseq
    %v816 = vshrl.u32 %v815, 7
    %v817 = vsub.s32 3, %v816
    %v818 = vrot.slane %v63, %v817
    %vm821 = vcmask 1041409
    %v822 = vsel %vm821, %v798, %v785
    %824 = vmatprep.subr.mxu0 0.0
    %825 = vmatpush1.msra.mxu0 %v799
    %826 = vmatprep.subr.mxu0 0.0
    %827 = vmatpush1.msra.mxu0 %v800
    %828 = vmatprep.subr.mxu0 0.0
    %829 = vmatpush1.msra.mxu0 %v801
    %830 = vmatprep.subr.mxu0 0.0
    %831 = vmatpush1.msra.mxu0 %v802
    %832 = vmatprep.subr.mxu0 0.0
    %833 = vmatpush1.msra.mxu0 %v803
    %834 = vmatprep.subr.mxu0 0.0
    %835 = vmatpush1.msra.mxu0 %v804
    %836 = vmatprep.subr.mxu0 0.0
    %837 = vmatpush1.msra.mxu0 %v805
    %838 = vmatprep.subr.mxu0 0.0
    %839 = vmatpush1.msra.mxu0 %v806
    %840 = vmatprep.subr.mxu0 0.0
    %841 = vmatpush1.msra.mxu0 %v807
    %842 = vmatprep.subr.mxu0 0.0
    %843 = vmatpush1.msra.mxu0 %v808
    %844 = vmatprep.subr.mxu0 0.0
    %845 = vmatpush1.msra.mxu0 %v809
    %846 = vmatprep.subr.mxu0 0.0
    %847 = vmatpush1.msra.mxu0 %v810
    %848 = vmatprep.subr.mxu0 0.0
    %849 = vmatpush1.msra.mxu0 %v811
    %850 = vmatprep.subr.mxu0 0.0
    %851 = vmatpush1.msra.mxu0 %v812
    %852 = vmatprep.subr.mxu0 0.0
    %853 = vmatpush1.msra.mxu0 %v813
    %854 = vmatprep.subr.mxu0 0.0
    %855 = vmatpush1.msra.mxu0 %v814
    %856 = vmatprep.subr.mxu0 0.0
    %857 = vmatpush1.msra.mxu0 0.0
    %858 = vmatprep.subr.mxu0 0.0
    %859 = vmatpush1.msra.mxu0 0.0
    %860 = vmatprep.subr.mxu0 0.0
    %861 = vmatpush1.msra.mxu0 0.0
    %862 = vmatprep.subr.mxu0 0.0
    %863 = vmatpush1.msra.mxu0 0.0
    %864 = vmatprep.subr.mxu0 0.0
    %865 = vmatpush1.msra.mxu0 0.0
    %866 = vmatprep.subr.mxu0 0.0
    %867 = vmatpush1.msra.mxu0 0.0
    %868 = vmatprep.subr.mxu0 0.0
    %869 = vmatpush1.msra.mxu0 0.0
    %870 = vmatprep.subr.mxu0 0.0
    %871 = vmatpush1.msra.mxu0 0.0
    %872 = vmatprep.subr.mxu0 0.0
    %873 = vmatpush1.msra.mxu0 0.0
    %874 = vmatprep.subr.mxu0 0.0
    %875 = vmatpush1.msra.mxu0 0.0
    %876 = vmatprep.subr.mxu0 0.0
    %877 = vmatpush1.msra.mxu0 0.0
    %878 = vmatprep.subr.mxu0 0.0
    %879 = vmatpush1.msra.mxu0 0.0
    %880 = vmatprep.subr.mxu0 0.0
    %881 = vmatpush1.msra.mxu0 0.0
    %882 = vmatprep.subr.mxu0 0.0
    %883 = vmatpush1.msra.mxu0 0.0
    %884 = vmatprep.subr.mxu0 0.0
    %885 = vmatpush1.msra.mxu0 0.0
    %886 = vmatprep.subr.mxu0 0.0
    %887 = vmatpush1.msra.mxu0 0.0
    %888 = vmatprep.mubr.f32.mxu0 0.0
    %889 = vmatmul.mubr.f32.gmra.mrb[0].mxu0 %v822
    %v890 = vpop.f32.mrb[0].mxu0
    %v891 = vadd.f32 %v818, %v890
    %v892 = vpop.f32.mrb[0].mxu0
    %893 = vdwg.mxu0
    %v894 = vld [vmem:[#allocation5 + $0x8] sm:$0xff]
    %v895 = vld [vmem:[#allocation5] sm:$0xff]
    %v896 = vlaneseq
    %v897 = vshrl.u32 %v896, 7
    %v898 = vsub.s32 0, %v897
    %v899 = vrot.slane %v894, %v898
    %900 = vmatprep.subr.mxu0 0.0
    %901 = vmatpush1.msra.mxu0 %v895
    %902 = vmatprep.subr.mxu0 0.0
    %903 = vmatpush1.msra.mxu0 0.0
    %904 = vmatprep.subr.mxu0 0.0
    %905 = vmatpush1.msra.mxu0 0.0
    %906 = vmatprep.subr.mxu0 0.0
    %907 = vmatpush1.msra.mxu0 0.0
    %908 = vmatprep.subr.mxu0 0.0
    %909 = vmatpush1.msra.mxu0 0.0
    %910 = vmatprep.subr.mxu0 0.0
    %911 = vmatpush1.msra.mxu0 0.0
    %912 = vmatprep.subr.mxu0 0.0
    %913 = vmatpush1.msra.mxu0 0.0
    %914 = vmatprep.subr.mxu0 0.0
    %915 = vmatpush1.msra.mxu0 0.0
    %916 = vmatprep.subr.mxu0 0.0
    %917 = vmatpush1.msra.mxu0 0.0
    %918 = vmatprep.subr.mxu0 0.0
    %919 = vmatpush1.msra.mxu0 0.0
    %920 = vmatprep.subr.mxu0 0.0
    %921 = vmatpush1.msra.mxu0 0.0
    %922 = vmatprep.subr.mxu0 0.0
    %923 = vmatpush1.msra.mxu0 0.0
    %924 = vmatprep.subr.mxu0 0.0
    %925 = vmatpush1.msra.mxu0 0.0
    %926 = vmatprep.subr.mxu0 0.0
    %927 = vmatpush1.msra.mxu0 0.0
    %928 = vmatprep.subr.mxu0 0.0
    %929 = vmatpush1.msra.mxu0 0.0
    %930 = vmatprep.subr.mxu0 0.0
    %931 = vmatpush1.msra.mxu0 0.0
    %932 = vmatprep.subr.mxu0 0.0
    %933 = vmatpush1.msra.mxu0 0.0
    %934 = vmatprep.subr.mxu0 0.0
    %935 = vmatpush1.msra.mxu0 0.0
    %936 = vmatprep.subr.mxu0 0.0
    %937 = vmatpush1.msra.mxu0 0.0
    %938 = vmatprep.subr.mxu0 0.0
    %939 = vmatpush1.msra.mxu0 0.0
    %940 = vmatprep.subr.mxu0 0.0
    %941 = vmatpush1.msra.mxu0 0.0
    %942 = vmatprep.subr.mxu0 0.0
    %943 = vmatpush1.msra.mxu0 0.0
    %944 = vmatprep.subr.mxu0 0.0
    %945 = vmatpush1.msra.mxu0 0.0
    %946 = vmatprep.subr.mxu0 0.0
    %947 = vmatpush1.msra.mxu0 0.0
    %948 = vmatprep.subr.mxu0 0.0
    %949 = vmatpush1.msra.mxu0 0.0
    %950 = vmatprep.subr.mxu0 0.0
    %951 = vmatpush1.msra.mxu0 0.0
    %952 = vmatprep.subr.mxu0 0.0
    %953 = vmatpush1.msra.mxu0 0.0
    %954 = vmatprep.subr.mxu0 0.0
    %955 = vmatpush1.msra.mxu0 0.0
    %956 = vmatprep.subr.mxu0 0.0
    %957 = vmatpush1.msra.mxu0 0.0
    %958 = vmatprep.subr.mxu0 0.0
    %959 = vmatpush1.msra.mxu0 0.0
    %960 = vmatprep.subr.mxu0 0.0
    %961 = vmatpush1.msra.mxu0 0.0
    %962 = vmatprep.subr.mxu0 0.0
    %963 = vmatpush1.msra.mxu0 0.0
    %964 = vmatprep.mubr.f32.mxu0 0.0
    %965 = vmatmul.mubr.f32.gmra.mrb[0].mxu0 %v439
    %v966 = vpop.f32.mrb[0].mxu0
    %v967 = vadd.f32 %v899, %v966
    %v968 = vpop.f32.mrb[0].mxu0
    %969 = vdwg.mxu0
    %v970 = vmax.f32 %v967, 0.0
    %v971 = vld [vmem:[#allocation5 + $0x10] sm:$0xff]
    %v972 = vld [vmem:[#allocation5 + $0x18] sm:$0xff]
    %v973 = vld [vmem:[#allocation5 + $0x20] sm:$0xff]
    %v974 = vld [vmem:[#allocation5 + $0x28] sm:$0xff]
    %v975 = vld [vmem:[#allocation5 + $0x30] sm:$0xff]
    %v976 = vld [vmem:[#allocation5 + $0x38] sm:$0xff]
    %v977 = vld [vmem:[#allocation5 + $0x40] sm:$0xff]
    %v978 = vld [vmem:[#allocation5 + $0x48] sm:$0xff]
    %v979 = vld [vmem:[#allocation5 + $0x50] sm:$0xff]
    %v980 = vld [vmem:[#allocation5 + $0x58] sm:$0xff]
    %v981 = vld [vmem:[#allocation5 + $0x60] sm:$0xff]
    %v982 = vld [vmem:[#allocation5 + $0x68] sm:$0xff]
    %v983 = vld [vmem:[#allocation5 + $0x70] sm:$0xff]
    %v984 = vld [vmem:[#allocation5 + $0x78] sm:$0xff]
    %v985 = vld [vmem:[#allocation5 + $0x80] sm:$0xff]
    %v986 = vld [vmem:[#allocation5 + $0x88] sm:$0xff]
    %v987 = vlaneseq
    %v988 = vshrl.u32 %v987, 7
    %v989 = vsub.s32 1, %v988
    %v990 = vrot.slane %v894, %v989
    %991 = vmatprep.subr.mxu0 0.0
    %992 = vmatpush1.msra.mxu0 %v971
    %993 = vmatprep.subr.mxu0 0.0
    %994 = vmatpush1.msra.mxu0 %v972
    %995 = vmatprep.subr.mxu0 0.0
    %996 = vmatpush1.msra.mxu0 %v973
    %997 = vmatprep.subr.mxu0 0.0
    %998 = vmatpush1.msra.mxu0 %v974
    %999 = vmatprep.subr.mxu0 0.0
    %1000 = vmatpush1.msra.mxu0 %v975
    %1001 = vmatprep.subr.mxu0 0.0
    %1002 = vmatpush1.msra.mxu0 %v976
    %1003 = vmatprep.subr.mxu0 0.0
    %1004 = vmatpush1.msra.mxu0 %v977
    %1005 = vmatprep.subr.mxu0 0.0
    %1006 = vmatpush1.msra.mxu0 %v978
    %1007 = vmatprep.subr.mxu0 0.0
    %1008 = vmatpush1.msra.mxu0 %v979
    %1009 = vmatprep.subr.mxu0 0.0
    %1010 = vmatpush1.msra.mxu0 %v980
    %1011 = vmatprep.subr.mxu0 0.0
    %1012 = vmatpush1.msra.mxu0 %v981
    %1013 = vmatprep.subr.mxu0 0.0
    %1014 = vmatpush1.msra.mxu0 %v982
    %1015 = vmatprep.subr.mxu0 0.0
    %1016 = vmatpush1.msra.mxu0 %v983
    %1017 = vmatprep.subr.mxu0 0.0
    %1018 = vmatpush1.msra.mxu0 %v984
    %1019 = vmatprep.subr.mxu0 0.0
    %1020 = vmatpush1.msra.mxu0 %v985
    %1021 = vmatprep.subr.mxu0 0.0
    %1022 = vmatpush1.msra.mxu0 %v986
    %1023 = vmatprep.subr.mxu0 0.0
    %1024 = vmatpush1.msra.mxu0 0.0
    %1025 = vmatprep.subr.mxu0 0.0
    %1026 = vmatpush1.msra.mxu0 0.0
    %1027 = vmatprep.subr.mxu0 0.0
    %1028 = vmatpush1.msra.mxu0 0.0
    %1029 = vmatprep.subr.mxu0 0.0
    %1030 = vmatpush1.msra.mxu0 0.0
    %1031 = vmatprep.subr.mxu0 0.0
    %1032 = vmatpush1.msra.mxu0 0.0
    %1033 = vmatprep.subr.mxu0 0.0
    %1034 = vmatpush1.msra.mxu0 0.0
    %1035 = vmatprep.subr.mxu0 0.0
    %1036 = vmatpush1.msra.mxu0 0.0
    %1037 = vmatprep.subr.mxu0 0.0
    %1038 = vmatpush1.msra.mxu0 0.0
    %1039 = vmatprep.subr.mxu0 0.0
    %1040 = vmatpush1.msra.mxu0 0.0
    %1041 = vmatprep.subr.mxu0 0.0
    %1042 = vmatpush1.msra.mxu0 0.0
    %1043 = vmatprep.subr.mxu0 0.0
    %1044 = vmatpush1.msra.mxu0 0.0
    %1045 = vmatprep.subr.mxu0 0.0
    %1046 = vmatpush1.msra.mxu0 0.0
    %1047 = vmatprep.subr.mxu0 0.0
    %1048 = vmatpush1.msra.mxu0 0.0
    %1049 = vmatprep.subr.mxu0 0.0
    %1050 = vmatpush1.msra.mxu0 0.0
    %1051 = vmatprep.subr.mxu0 0.0
    %1052 = vmatpush1.msra.mxu0 0.0
    %1053 = vmatprep.subr.mxu0 0.0
    %1054 = vmatpush1.msra.mxu0 0.0
    %1055 = vmatprep.mubr.f32.mxu0 0.0
    %1056 = vmatmul.mubr.f32.gmra.mrb[0].mxu0 %v970
    %v1057 = vpop.f32.mrb[0].mxu0
    %v1058 = vadd.f32 %v990, %v1057
    %v1059 = vpop.f32.mrb[0].mxu0
    %1060 = vdwg.mxu0
    %v1061 = vld [vmem:[#allocation5 + $0x90] sm:$0xff]
    %v1062 = vld [vmem:[#allocation5 + $0x98] sm:$0xff]
    %v1063 = vld [vmem:[#allocation5 + $0xa0] sm:$0xff]
    %v1064 = vld [vmem:[#allocation5 + $0xa8] sm:$0xff]
    %v1065 = vld [vmem:[#allocation5 + $0xb0] sm:$0xff]
    %v1066 = vld [vmem:[#allocation5 + $0xb8] sm:$0xff]
    %v1067 = vld [vmem:[#allocation5 + $0xc0] sm:$0xff]
    %v1068 = vld [vmem:[#allocation5 + $0xc8] sm:$0xff]
    %v1069 = vld [vmem:[#allocation5 + $0xd0] sm:$0xff]
    %v1070 = vld [vmem:[#allocation5 + $0xd8] sm:$0xff]
    %v1071 = vld [vmem:[#allocation5 + $0xe0] sm:$0xff]
    %v1072 = vld [vmem:[#allocation5 + $0xe8] sm:$0xff]
    %v1073 = vld [vmem:[#allocation5 + $0xf0] sm:$0xff]
    %v1074 = vld [vmem:[#allocation5 + $0xf8] sm:$0xff]
    %v1075 = vld [vmem:[#allocation5 + $0x100] sm:$0xff]
    %v1076 = vld [vmem:[#allocation5 + $0x108] sm:$0xff]
    %v1077 = vld [vmem:[#allocation5 + $0x110] sm:$0xff]
    %v1078 = vld [vmem:[#allocation5 + $0x118] sm:$0xff]
    %v1079 = vld [vmem:[#allocation5 + $0x120] sm:$0xff]
    %v1080 = vld [vmem:[#allocation5 + $0x128] sm:$0xff]
    %v1081 = vld [vmem:[#allocation5 + $0x130] sm:$0xff]
    %v1082 = vld [vmem:[#allocation5 + $0x138] sm:$0xff]
    %v1083 = vld [vmem:[#allocation5 + $0x140] sm:$0xff]
    %v1084 = vld [vmem:[#allocation5 + $0x148] sm:$0xff]
    %v1085 = vld [vmem:[#allocation5 + $0x150] sm:$0xff]
    %v1086 = vld [vmem:[#allocation5 + $0x158] sm:$0xff]
    %v1087 = vld [vmem:[#allocation5 + $0x160] sm:$0xff]
    %v1088 = vld [vmem:[#allocation5 + $0x168] sm:$0xff]
    %v1089 = vld [vmem:[#allocation5 + $0x170] sm:$0xff]
    %v1090 = vld [vmem:[#allocation5 + $0x178] sm:$0xff]
    %v1091 = vld [vmem:[#allocation5 + $0x180] sm:$0xff]
    %v1092 = vld [vmem:[#allocation5 + $0x188] sm:$0xff]
    %1093 = vmatprep.subr.mxu0 0.0
    %1094 = vmatpush1.msra.mxu0 %v1077
    %1095 = vmatprep.subr.mxu0 0.0
    %1096 = vmatpush1.msra.mxu0 %v1078
    %1097 = vmatprep.subr.mxu0 0.0
    %1098 = vmatpush1.msra.mxu0 %v1079
    %1099 = vmatprep.subr.mxu0 0.0
    %1100 = vmatpush1.msra.mxu0 %v1080
    %1101 = vmatprep.subr.mxu0 0.0
    %1102 = vmatpush1.msra.mxu0 %v1081
    %1103 = vmatprep.subr.mxu0 0.0
    %1104 = vmatpush1.msra.mxu0 %v1082
    %1105 = vmatprep.subr.mxu0 0.0
    %1106 = vmatpush1.msra.mxu0 %v1083
    %1107 = vmatprep.subr.mxu0 0.0
    %1108 = vmatpush1.msra.mxu0 %v1084
    %1109 = vmatprep.subr.mxu0 0.0
    %1110 = vmatpush1.msra.mxu0 %v1085
    %1111 = vmatprep.subr.mxu0 0.0
    %1112 = vmatpush1.msra.mxu0 %v1086
    %1113 = vmatprep.subr.mxu0 0.0
    %1114 = vmatpush1.msra.mxu0 %v1087
    %1115 = vmatprep.subr.mxu0 0.0
    %1116 = vmatpush1.msra.mxu0 %v1088
    %1117 = vmatprep.subr.mxu0 0.0
    %1118 = vmatpush1.msra.mxu0 %v1089
    %1119 = vmatprep.subr.mxu0 0.0
    %1120 = vmatpush1.msra.mxu0 %v1090
    %1121 = vmatprep.subr.mxu0 0.0
    %1122 = vmatpush1.msra.mxu0 %v1091
    %1123 = vmatprep.subr.mxu0 0.0
    %1124 = vmatpush1.msra.mxu0 %v1092
    %1125 = vmatprep.subr.mxu0 0.0
    %1126 = vmatpush1.msra.mxu0 0.0
    %1127 = vmatprep.subr.mxu0 0.0
    %1128 = vmatpush1.msra.mxu0 0.0
    %1129 = vmatprep.subr.mxu0 0.0
    %1130 = vmatpush1.msra.mxu0 0.0
    %1131 = vmatprep.subr.mxu0 0.0
    %1132 = vmatpush1.msra.mxu0 0.0
    %1133 = vmatprep.subr.mxu0 0.0
    %1134 = vmatpush1.msra.mxu0 0.0
    %1135 = vmatprep.subr.mxu0 0.0
    %1136 = vmatpush1.msra.mxu0 0.0
    %1137 = vmatprep.subr.mxu0 0.0
    %1138 = vmatpush1.msra.mxu0 0.0
    %1139 = vmatprep.subr.mxu0 0.0
    %1140 = vmatpush1.msra.mxu0 0.0
    %1141 = vmatprep.subr.mxu0 0.0
    %1142 = vmatpush1.msra.mxu0 0.0
    %1143 = vmatprep.subr.mxu0 0.0
    %1144 = vmatpush1.msra.mxu0 0.0
    %1145 = vmatprep.subr.mxu0 0.0
    %1146 = vmatpush1.msra.mxu0 0.0
    %1147 = vmatprep.subr.mxu0 0.0
    %1148 = vmatpush1.msra.mxu0 0.0
    %1149 = vmatprep.subr.mxu0 0.0
    %1150 = vmatpush1.msra.mxu0 0.0
    %1151 = vmatprep.subr.mxu0 0.0
    %1152 = vmatpush1.msra.mxu0 0.0
    %1153 = vmatprep.subr.mxu0 0.0
    %1154 = vmatpush1.msra.mxu0 0.0
    %1155 = vmatprep.subr.mxu0 0.0
    %1156 = vmatpush1.msra.mxu0 0.0
    %1157 = vmatprep.mubr.f32.mxu0 0.0
    %1158 = vmatmul.mubr.f32.gmra.mrb[0].mxu0 %v891
    %v1159 = vpop.f32.mrb[0].mxu0
    %v1160 = vadd.f32 0.0, %v1159
    %v1161 = vpop.f32.mrb[0].mxu0
    %1162 = vdwg.mxu0
    %1163 = vmatprep.subr.mxu0 0.0
    %1164 = vmatpush1.msra.mxu0 %v1061
    %1165 = vmatprep.subr.mxu0 0.0
    %1166 = vmatpush1.msra.mxu0 %v1062
    %1167 = vmatprep.subr.mxu0 0.0
    %1168 = vmatpush1.msra.mxu0 %v1063
    %1169 = vmatprep.subr.mxu0 0.0
    %1170 = vmatpush1.msra.mxu0 %v1064
    %1171 = vmatprep.subr.mxu0 0.0
    %1172 = vmatpush1.msra.mxu0 %v1065
    %1173 = vmatprep.subr.mxu0 0.0
    %1174 = vmatpush1.msra.mxu0 %v1066
    %1175 = vmatprep.subr.mxu0 0.0
    %1176 = vmatpush1.msra.mxu0 %v1067
    %1177 = vmatprep.subr.mxu0 0.0
    %1178 = vmatpush1.msra.mxu0 %v1068
    %1179 = vmatprep.subr.mxu0 0.0
    %1180 = vmatpush1.msra.mxu0 %v1069
    %1181 = vmatprep.subr.mxu0 0.0
    %1182 = vmatpush1.msra.mxu0 %v1070
    %1183 = vmatprep.subr.mxu0 0.0
    %1184 = vmatpush1.msra.mxu0 %v1071
    %1185 = vmatprep.subr.mxu0 0.0
    %1186 = vmatpush1.msra.mxu0 %v1072
    %1187 = vmatprep.subr.mxu0 0.0
    %1188 = vmatpush1.msra.mxu0 %v1073
    %1189 = vmatprep.subr.mxu0 0.0
    %1190 = vmatpush1.msra.mxu0 %v1074
    %1191 = vmatprep.subr.mxu0 0.0
    %1192 = vmatpush1.msra.mxu0 %v1075
    %1193 = vmatprep.subr.mxu0 0.0
    %1194 = vmatpush1.msra.mxu0 %v1076
    %1195 = vmatprep.subr.mxu0 0.0
    %1196 = vmatpush1.msra.mxu0 0.0
    %1197 = vmatprep.subr.mxu0 0.0
    %1198 = vmatpush1.msra.mxu0 0.0
    %1199 = vmatprep.subr.mxu0 0.0
    %1200 = vmatpush1.msra.mxu0 0.0
    %1201 = vmatprep.subr.mxu0 0.0
    %1202 = vmatpush1.msra.mxu0 0.0
    %1203 = vmatprep.subr.mxu0 0.0
    %1204 = vmatpush1.msra.mxu0 0.0
    %1205 = vmatprep.subr.mxu0 0.0
    %1206 = vmatpush1.msra.mxu0 0.0
    %1207 = vmatprep.subr.mxu0 0.0
    %1208 = vmatpush1.msra.mxu0 0.0
    %1209 = vmatprep.subr.mxu0 0.0
    %1210 = vmatpush1.msra.mxu0 0.0
    %1211 = vmatprep.subr.mxu0 0.0
    %1212 = vmatpush1.msra.mxu0 0.0
    %1213 = vmatprep.subr.mxu0 0.0
    %1214 = vmatpush1.msra.mxu0 0.0
    %1215 = vmatprep.subr.mxu0 0.0
    %1216 = vmatpush1.msra.mxu0 0.0
    %1217 = vmatprep.subr.mxu0 0.0
    %1218 = vmatpush1.msra.mxu0 0.0
    %1219 = vmatprep.subr.mxu0 0.0
    %1220 = vmatpush1.msra.mxu0 0.0
    %1221 = vmatprep.subr.mxu0 0.0
    %1222 = vmatpush1.msra.mxu0 0.0
    %1223 = vmatprep.subr.mxu0 0.0
    %1224 = vmatpush1.msra.mxu0 0.0
    %1225 = vmatprep.subr.mxu0 0.0
    %1226 = vmatpush1.msra.mxu0 0.0
    %1227 = vmatprep.mubr.f32.mxu0 0.0
    %1228 = vmatmul.mubr.f32.gmra.mrb[0].mxu0 %v1058
    %v1229 = vpop.f32.mrb[0].mxu0
    %v1230 = vadd.f32 %v1160, %v1229
    %v1231 = vpop.f32.mrb[0].mxu0
    %1232 = vdwg.mxu0
    %v1233 = vlaneseq
    %v1234 = vshrl.u32 %v1233, 7
    %v1235 = vsub.s32 2, %v1234
    %v1236 = vrot.slane %v894, %v1235
    %v1237 = vadd.f32 %v1230, %v1236
    %v1238 = vmax.f32 %v1237, 0.0
    %v1239 = vld [vmem:[#allocation5 + $0x190] sm:$0xff]
    %v1240 = vld [vmem:[#allocation5 + $0x198] sm:$0xff]
    %v1241 = vld [vmem:[#allocation5 + $0x1a0] sm:$0xff]
    %v1242 = vld [vmem:[#allocation5 + $0x1a8] sm:$0xff]
    %v1243 = vld [vmem:[#allocation5 + $0x1b0] sm:$0xff]
    %v1244 = vld [vmem:[#allocation5 + $0x1b8] sm:$0xff]
    %v1245 = vld [vmem:[#allocation5 + $0x1c0] sm:$0xff]
    %v1246 = vld [vmem:[#allocation5 + $0x1c8] sm:$0xff]
    %v1247 = vld [vmem:[#allocation5 + $0x1d0] sm:$0xff]
    %v1248 = vld [vmem:[#allocation5 + $0x1d8] sm:$0xff]
    %v1249 = vld [vmem:[#allocation5 + $0x1e0] sm:$0xff]
    %v1250 = vld [vmem:[#allocation5 + $0x1e8] sm:$0xff]
    %v1251 = vld [vmem:[#allocation5 + $0x1f0] sm:$0xff]
    %v1252 = vld [vmem:[#allocation5 + $0x1f8] sm:$0xff]
    %v1253 = vld [vmem:[#allocation5 + $0x200] sm:$0xff]
    %v1254 = vld [vmem:[#allocation5 + $0x208] sm:$0xff]
    %v1255 = vlaneseq
    %v1256 = vshrl.u32 %v1255, 7
    %v1257 = vsub.s32 3, %v1256
    %v1258 = vrot.slane %v894, %v1257
    %1259 = vmatprep.subr.mxu0 0.0
    %1260 = vmatpush1.msra.mxu0 %v1239
    %1261 = vmatprep.subr.mxu0 0.0
    %1262 = vmatpush1.msra.mxu0 %v1240
    %1263 = vmatprep.subr.mxu0 0.0
    %1264 = vmatpush1.msra.mxu0 %v1241
    %1265 = vmatprep.subr.mxu0 0.0
    %1266 = vmatpush1.msra.mxu0 %v1242
    %1267 = vmatprep.subr.mxu0 0.0
    %1268 = vmatpush1.msra.mxu0 %v1243
    %1269 = vmatprep.subr.mxu0 0.0
    %1270 = vmatpush1.msra.mxu0 %v1244
    %1271 = vmatprep.subr.mxu0 0.0
    %1272 = vmatpush1.msra.mxu0 %v1245
    %1273 = vmatprep.subr.mxu0 0.0
    %1274 = vmatpush1.msra.mxu0 %v1246
    %1275 = vmatprep.subr.mxu0 0.0
    %1276 = vmatpush1.msra.mxu0 %v1247
    %1277 = vmatprep.subr.mxu0 0.0
    %1278 = vmatpush1.msra.mxu0 %v1248
    %1279 = vmatprep.subr.mxu0 0.0
    %1280 = vmatpush1.msra.mxu0 %v1249
    %1281 = vmatprep.subr.mxu0 0.0
    %1282 = vmatpush1.msra.mxu0 %v1250
    %1283 = vmatprep.subr.mxu0 0.0
    %1284 = vmatpush1.msra.mxu0 %v1251
    %1285 = vmatprep.subr.mxu0 0.0
    %1286 = vmatpush1.msra.mxu0 %v1252
    %1287 = vmatprep.subr.mxu0 0.0
    %1288 = vmatpush1.msra.mxu0 %v1253
    %1289 = vmatprep.subr.mxu0 0.0
    %1290 = vmatpush1.msra.mxu0 %v1254
    %1291 = vmatprep.subr.mxu0 0.0
    %1292 = vmatpush1.msra.mxu0 0.0
    %1293 = vmatprep.subr.mxu0 0.0
    %1294 = vmatpush1.msra.mxu0 0.0
    %1295 = vmatprep.subr.mxu0 0.0
    %1296 = vmatpush1.msra.mxu0 0.0
    %1297 = vmatprep.subr.mxu0 0.0
    %1298 = vmatpush1.msra.mxu0 0.0
    %1299 = vmatprep.subr.mxu0 0.0
    %1300 = vmatpush1.msra.mxu0 0.0
    %1301 = vmatprep.subr.mxu0 0.0
    %1302 = vmatpush1.msra.mxu0 0.0
    %1303 = vmatprep.subr.mxu0 0.0
    %1304 = vmatpush1.msra.mxu0 0.0
    %1305 = vmatprep.subr.mxu0 0.0
    %1306 = vmatpush1.msra.mxu0 0.0
    %1307 = vmatprep.subr.mxu0 0.0
    %1308 = vmatpush1.msra.mxu0 0.0
    %1309 = vmatprep.subr.mxu0 0.0
    %1310 = vmatpush1.msra.mxu0 0.0
    %1311 = vmatprep.subr.mxu0 0.0
    %1312 = vmatpush1.msra.mxu0 0.0
    %1313 = vmatprep.subr.mxu0 0.0
    %1314 = vmatpush1.msra.mxu0 0.0
    %1315 = vmatprep.subr.mxu0 0.0
    %1316 = vmatpush1.msra.mxu0 0.0
    %1317 = vmatprep.subr.mxu0 0.0
    %1318 = vmatpush1.msra.mxu0 0.0
    %1319 = vmatprep.subr.mxu0 0.0
    %1320 = vmatpush1.msra.mxu0 0.0
    %1321 = vmatprep.subr.mxu0 0.0
    %1322 = vmatpush1.msra.mxu0 0.0
    %1323 = vmatprep.mubr.f32.mxu0 0.0
    %1324 = vmatmul.mubr.f32.gmra.mrb[0].mxu0 %v1238
    %v1325 = vpop.f32.mrb[0].mxu0
    %v1326 = vadd.f32 %v1258, %v1325
    %v1327 = vpop.f32.mrb[0].mxu0
    %1328 = vdwg.mxu0
    %1329 = vst [vmem:[#allocation7] sm:$0x3] %v1326
    // Predicated region
    $region26: #{pointnet_with_instance_info_forward.1} parent=1 // pred_check
      _
    $region27: #{pointnet_with_instance_info_forward.1} parent=1 // pred_check_branch
      %1331 = sbr.rel (0) target = $region29
    $region28: #{pointnet_with_instance_info_forward.1} parent=1 // pred_region
      %s1333 = ssub.s32 32, 32
      %1334 = vsyncadd [#allocation4], %s1333
      %s1336 = sshll.u32 [#allocation7], 4
      %s1337 = int_to_ptr.vmem [resolvable:$true] %s1336
      %1339 = dma.vmem_to_hbm [thread:$0]  %s1337, 32, %s4, [#allocation4]
    $region29: #{pointnet_with_instance_info_forward.1} parent=1 // pred_fallthru
      _
    // Predicated region
    $region30: #{pointnet_with_instance_info_forward.1} parent=1 // pred_check
      _
    $region31: #{pointnet_with_instance_info_forward.1} parent=1 // pred_check_branch
      %1341 = sbr.rel (0) target = $region33
    $region32: #{pointnet_with_instance_info_forward.1} parent=1 // pred_region
      %1342 = dma.done [#allocation4], 32
    $region33: #{pointnet_with_instance_info_forward.1} parent=1 // pred_fallthru
      _
    %1343 = vsyncpa [#allocation3], 1
    %1344 = vsyncpa [#allocation6], 1
    %1345 = vsyncpa [#allocation4], 1

</llo_original>
